<compile_context>
chip_gen: v5e
topology: v5e:2x2
jax: 0.10.0
libtpu: 0.0.40
codegen_flags: <defaults>
</compile_context>

<pallas_src>
import functools

import jax
import jax.numpy as jnp
import numpy as np
from jax.experimental import pallas as pl
from jax.experimental.pallas import tpu as pltpu


def cbam_kernel(x_ref, w1t_ref, b1_ref, w2t_ref, b2_ref, wm_ref, cb_ref,
                out_ref, *, W, Bt):
    HW = x_ref.shape[-1]

    x = x_ref[...]
    xf = x.astype(jnp.float32)                          # (Bt, C, HW)

    # ---------------- channel attention (GAP + GMP -> shared MLP) -----------
    avg_c = jnp.mean(xf, axis=2)                        # (Bt, C)
    max_c = jnp.max(xf, axis=2)                         # (Bt, C)
    pooled = jnp.concatenate([avg_c, max_c], axis=0)    # (2*Bt, C)

    h = jnp.maximum(
        jnp.dot(pooled, w1t_ref[...], preferred_element_type=jnp.float32)
        + b1_ref[...], 0.0)                             # (2*Bt, hidden)
    o = (jnp.dot(h, w2t_ref[...], preferred_element_type=jnp.float32)
         + b2_ref[...])                                 # (2*Bt, C)
    gate_c = jax.nn.sigmoid(o[:Bt] + o[Bt:])            # (Bt, C)

    # TODO(synk): gate_c leaves the matmul with C on lanes but is consumed
    # with C on sublanes; for large C compute the MLP transposed to keep the
    # implicit relayout off the roll-saturated XLU slot.
    xc = xf * gate_c[:, :, None]                        # (Bt, C, HW) f32

    # ---------------- spatial attention (7x7 conv via lane rolls) -----------
    # avg and max stats stacked on sublanes: one roll per tap serves both.
    avg_s = jnp.mean(xc, axis=1)                        # (Bt, HW)
    max_s = jnp.max(xc, axis=1)                         # (Bt, HW)
    stacked = jnp.concatenate([avg_s, max_s], axis=0)   # (2*Bt, HW)

    # wm_ref[tap] rows = [avg-weight * edge-mask] * Bt ++ [max-weight * mask] * Bt,
    # pre-folded host-side, so each tap is one XLU roll + one VALU FMA.
    acc = wm_ref[24] * stacked                          # center tap: no roll
    for ki in range(7):
        for kj in range(7):
            tap = ki * 7 + kj
            if tap == 24:
                continue
            off = (ki - 3) * W + (kj - 3)
            shift = (-off) % HW                         # positive lane rotation
            acc = acc + wm_ref[tap] * pltpu.roll(stacked, shift, 1)

    sp = acc[:Bt] + acc[Bt:] + cb_ref[0]                # fold avg/max halves once
    gate_s = jax.nn.sigmoid(sp)                         # (Bt, HW)

    # ---------------- apply spatial gate: one lane-dense store ---------------
    out_ref[...] = (xc * gate_s[:, None, :]).astype(out_ref.dtype)


def _vmem_capacity_bytes():
    try:
        return int(pltpu.get_tpu_info().vmem_capacity_bytes)
    except Exception:
        return 64 << 20                                  # conservative (v7x floor)


def _pick_batch_tile(B, per_b_bytes, budget_bytes):
    divisors = [d for d in range(1, B + 1) if B % d == 0]
    cands = [d for d in divisors if d * per_b_bytes <= budget_bytes] or [1]
    # Prefer >= 2 grid steps: v7x shards the "parallel" batch axis across its
    # 2 TensorCores and BlockSpec double-buffering gets something to overlap.
    multi = [d for d in cands if B // d >= 2]
    pool = multi if multi else cands
    # Prefer 2*Bt a multiple of 8 so the stacked (2*Bt, HW) operand fills
    # sublanes (bigger effective VALU/XLU throughput for small batches).
    aligned = [d for d in pool if (2 * d) % 8 == 0]
    return max(aligned if aligned else pool)


def cbam_forward(x, w1, b1, w2, b2, conv_w, conv_b):
    """x: (B, C, H, W). w1: (hidden, C), b1: (hidden,), w2: (C, hidden),
    b2: (C,), conv_w: (1, 2, 7, 7), conv_b: (1,)."""
    B, C, H, W = x.shape
    HW = H * W
    hidden = w1.shape[0]
    itemsize = jnp.dtype(x.dtype).itemsize

    vmem_cap = _vmem_capacity_bytes()
    vmem_limit = min(int(vmem_cap * 3 // 4), 96 << 20)   # ~48 MiB v7x, 96 MiB v5e/v6e
    budget = max(1 << 20, min(8 << 20, vmem_cap // 32))

    # Rough per-Bt VMEM footprint: double-buffered in/out blocks, resident
    # weighted-mask slab (x2 buffers), plus the in-kernel f32 temporaries.
    per_b = C * HW * (2 * 2 * itemsize + 3 * 4) + 2 * 49 * 2 * HW * 4
    Bt = _pick_batch_tile(B, per_b, budget)

    x_flat = x.reshape(B, C, HW)
    w1t = jnp.asarray(w1, jnp.float32).T                 # (C, hidden)
    b1r = jnp.asarray(b1, jnp.float32).reshape(1, hidden)
    w2t = jnp.asarray(w2, jnp.float32).T                 # (hidden, C)
    b2r = jnp.asarray(b2, jnp.float32).reshape(1, C)
    cb = jnp.asarray(conv_b, jnp.float32).reshape(1)

    # Pre-fold the 49 conv-tap weights into the flat-HW edge masks (wrapped
    # rolls across row/image boundaries are zeroed by the mask).
    lane = np.arange(HW)
    col, row = lane % W, lane // W
    mask_np = np.empty((49, HW), np.float32)
    for ki in range(7):
        for kj in range(7):
            di, dj = ki - 3, kj - 3
            mask_np[ki * 7 + kj] = (
                (row + di >= 0) & (row + di < H)
                & (col + dj >= 0) & (col + dj < W)).astype(np.float32)
    cwf = jnp.asarray(conv_w, jnp.float32).reshape(2, 49)          # (in_ch, tap)
    wm = cwf.T[:, :, None] * jnp.asarray(mask_np)[:, None, :]      # (49, 2, HW)
    wm = jnp.repeat(wm, Bt, axis=1)                                # (49, 2*Bt, HW)

    try:
        cost = pl.CostEstimate(
            flops=int(6 * B * C * HW + 200 * B * HW + 8 * B * C * hidden),
            transcendentals=int(B * (C + HW)),
            bytes_accessed=int(2 * B * C * HW * itemsize + wm.size * 4))
    except Exception:
        cost = None

    kernel = functools.partial(cbam_kernel, W=W, Bt=Bt)
    out = pl.pallas_call(
        kernel,
        out_shape=jax.ShapeDtypeStruct((B, C, HW), x.dtype),
        grid_spec=pltpu.PrefetchScalarGridSpec(
            num_scalar_prefetch=0,
            grid=(B // Bt,),
            in_specs=[
                pl.BlockSpec((Bt, C, HW), lambda b: (b, 0, 0)),
                pl.BlockSpec((C, hidden), lambda b: (0, 0)),
                pl.BlockSpec((1, hidden), lambda b: (0, 0)),
                pl.BlockSpec((hidden, C), lambda b: (0, 0)),
                pl.BlockSpec((1, C), lambda b: (0, 0)),
                pl.BlockSpec((49, 2 * Bt, HW), lambda b: (0, 0, 0)),
                pl.BlockSpec(memory_space=pltpu.MemorySpace.SMEM),
            ],
            out_specs=pl.BlockSpec((Bt, C, HW), lambda b: (b, 0, 0)),
        ),
        compiler_params=pltpu.CompilerParams(
            dimension_semantics=("parallel",),
            vmem_limit_bytes=vmem_limit),
        cost_estimate=cost,
    )(x_flat, w1t, b1r, w2t, b2r, wm, cb)
    return out.reshape(B, C, H, W)


def cbam_reference(x, w1, b1, w2, b2, conv_w, conv_b):
    """Pure-JAX reference matching the PyTorch forward."""
    avg = x.mean(axis=(2, 3))                           # (B, C)
    mx = x.max(axis=(2, 3))                             # (B, C)

    def mlp(p):
        h = jnp.maximum(p @ w1.T + b1, 0.0)
        return h @ w2.T + b2

    gate_c = jax.nn.sigmoid(mlp(avg) + mlp(mx))[:, :, None, None]
    xc = x * gate_c
    avg_s = xc.mean(axis=1, keepdims=True)
    max_s = xc.max(axis=1, keepdims=True)
    sp_in = jnp.concatenate([avg_s, max_s], axis=1)     # (B, 2, H, W)
    sp = jax.lax.conv_general_dilated(
        sp_in, conv_w, window_strides=(1, 1),
        padding=((3, 3), (3, 3)),
        dimension_numbers=("NCHW", "OIHW", "NCHW")) + conv_b[0]
    return xc * jax.nn.sigmoid(sp)


if __name__ == "__main__":
    B, C, H, W = 2, 16, 16, 16
    reduction = 8
    hidden = C // reduction

    key = jax.random.PRNGKey(0)
    ks = jax.random.split(key, 7)
    x = jax.random.normal(ks[0], (B, C, H, W), jnp.float32)
    # Deterministic synthetic parameters (shapes from CBAMBlock.__init__).
    w1 = jax.random.normal(ks[1], (hidden, C), jnp.float32) * 0.3       # fc[0].weight
    b1 = jax.random.normal(ks[2], (hidden,), jnp.float32) * 0.1         # fc[0].bias
    w2 = jax.random.normal(ks[3], (C, hidden), jnp.float32) * 0.3       # fc[2].weight
    b2 = jax.random.normal(ks[4], (C,), jnp.float32) * 0.1              # fc[2].bias
    conv_w = jax.random.normal(ks[5], (1, 2, 7, 7), jnp.float32) * 0.1  # conv.weight
    conv_b = jax.random.normal(ks[6], (1,), jnp.float32) * 0.1          # conv.bias

    out = jax.block_until_ready(cbam_forward(x, w1, b1, w2, b2, conv_w, conv_b))
    ref = cbam_reference(x, w1, b1, w2, b2, conv_w, conv_b)
    np.testing.assert_allclose(np.asarray(out), np.asarray(ref),
                               rtol=1e-3, atol=1e-3)
    print("KERNEL_OK")
</pallas_src>

<mosaic_0001>
module attributes {stable_mosaic.version = 11 : i64} {
  func.func @cbam_kernel(%arg0: i32, %arg1: memref<1x16x256xf32, #tpu.memory_space<vmem>>, %arg2: memref<16x2xf32, #tpu.memory_space<vmem>>, %arg3: memref<1x2xf32, #tpu.memory_space<vmem>>, %arg4: memref<2x16xf32, #tpu.memory_space<vmem>>, %arg5: memref<1x16xf32, #tpu.memory_space<vmem>>, %arg6: memref<49x2x256xf32, #tpu.memory_space<vmem>>, %arg7: memref<1xf32, #tpu.memory_space<smem>>, %arg8: memref<1x16x256xf32, #tpu.memory_space<vmem>>) attributes {dimension_semantics = [#tpu.dimension_semantics<parallel>], iteration_bounds = array<i64: 2>, scalar_prefetch = 0 : i64, scratch_operands = 0 : i64, tpu.core_type = #tpu.core_type<tc>, window_params = [{transform_indices = @transform_0, window_bounds = array<i64: 1, 16, 256>}, {pipeline_mode = #tpu.pipeline_mode<synchronous>, transform_indices = @transform_1, window_bounds = array<i64: 16, 2>}, {pipeline_mode = #tpu.pipeline_mode<synchronous>, transform_indices = @transform_2, window_bounds = array<i64: 1, 2>}, {pipeline_mode = #tpu.pipeline_mode<synchronous>, transform_indices = @transform_3, window_bounds = array<i64: 2, 16>}, {pipeline_mode = #tpu.pipeline_mode<synchronous>, transform_indices = @transform_4, window_bounds = array<i64: 1, 16>}, {pipeline_mode = #tpu.pipeline_mode<synchronous>, transform_indices = @transform_5, window_bounds = array<i64: 49, 2, 256>}, {transform_indices = @transform_6, window_bounds = array<i64: 1>}, {transform_indices = @transform_7, window_bounds = array<i64: 1, 16, 256>}]} {
    %c0 = arith.constant 0 : index
    %c0_0 = arith.constant 0 : index
    %c0_1 = arith.constant 0 : index
    %0 = vector.load %arg1[%c0, %c0_0, %c0_1] : memref<1x16x256xf32, #tpu.memory_space<vmem>>, vector<1x16x256xf32>
    %cst = arith.constant dense<0.000000e+00> : vector<1x16xf32>
    %1 = vector.multi_reduction <add>, %0, %cst [2] : vector<1x16x256xf32> to vector<1x16xf32>
    %cst_2 = arith.constant 2.560000e+02 : f32
    %2 = vector.broadcast %cst_2 : f32 to vector<1x16xf32>
    %3 = arith.divf %1, %2 : vector<1x16xf32>
    %cst_3 = arith.constant dense<0xFF800000> : vector<1x16xf32>
    %4 = vector.multi_reduction <maximumf>, %0, %cst_3 [2] : vector<1x16x256xf32> to vector<1x16xf32>
    %5 = tpu.concatenate %3, %4 in 0 : vector<1x16xf32>, vector<1x16xf32> -> vector<2x16xf32>
    %c0_4 = arith.constant 0 : index
    %c0_5 = arith.constant 0 : index
    %6 = vector.load %arg2[%c0_4, %c0_5] : memref<16x2xf32, #tpu.memory_space<vmem>>, vector<16x2xf32>
    %cst_6 = arith.constant dense<0.000000e+00> : vector<2x2xf32>
    %7 = tpu.matmul %5, %6, %cst_6 {dimension_numbers = #tpu.dot_dimension_numbers<[1], [0], [0], [1], [0, 0, 1, 1], [], []>} : vector<2x16xf32>, vector<16x2xf32>, vector<2x2xf32> -> vector<2x2xf32>
    %c0_7 = arith.constant 0 : index
    %c0_8 = arith.constant 0 : index
    %8 = vector.load %arg3[%c0_7, %c0_8] : memref<1x2xf32, #tpu.memory_space<vmem>>, vector<1x2xf32>
    %9 = vector.broadcast %8 : vector<1x2xf32> to vector<2x2xf32>
    %10 = arith.addf %7, %9 : vector<2x2xf32>
    %cst_9 = arith.constant 0.000000e+00 : f32
    %11 = vector.broadcast %cst_9 : f32 to vector<2x2xf32>
    %12 = arith.maximumf %10, %11 : vector<2x2xf32>
    %c0_10 = arith.constant 0 : index
    %c0_11 = arith.constant 0 : index
    %13 = vector.load %arg4[%c0_10, %c0_11] : memref<2x16xf32, #tpu.memory_space<vmem>>, vector<2x16xf32>
    %cst_12 = arith.constant dense<0.000000e+00> : vector<2x16xf32>
    %14 = tpu.matmul %12, %13, %cst_12 {dimension_numbers = #tpu.dot_dimension_numbers<[1], [0], [0], [1], [0, 0, 1, 1], [], []>} : vector<2x2xf32>, vector<2x16xf32>, vector<2x16xf32> -> vector<2x16xf32>
    %c0_13 = arith.constant 0 : index
    %c0_14 = arith.constant 0 : index
    %15 = vector.load %arg5[%c0_13, %c0_14] : memref<1x16xf32, #tpu.memory_space<vmem>>, vector<1x16xf32>
    %16 = vector.broadcast %15 : vector<1x16xf32> to vector<2x16xf32>
    %17 = arith.addf %14, %16 : vector<2x16xf32>
    %18 = vector.extract_strided_slice %17 {offsets = [0, 0], sizes = [1, 16], strides = [1, 1]} : vector<2x16xf32> to vector<1x16xf32>
    %19 = vector.extract_strided_slice %17 {offsets = [1, 0], sizes = [1, 16], strides = [1, 1]} : vector<2x16xf32> to vector<1x16xf32>
    %20 = arith.addf %18, %19 : vector<1x16xf32>
    %21 = arith.negf %20 : vector<1x16xf32>
    %22 = math.exp %21 : vector<1x16xf32>
    %cst_15 = arith.constant 1.000000e+00 : f32
    %23 = vector.broadcast %cst_15 : f32 to vector<1x16xf32>
    %24 = arith.addf %23, %22 : vector<1x16xf32>
    %25 = arith.divf %23, %24 : vector<1x16xf32>
    %26 = vector.shape_cast %25 : vector<1x16xf32> to vector<1x16x1xf32>
    %27 = vector.broadcast %26 : vector<1x16x1xf32> to vector<1x16x256xf32>
    %28 = arith.mulf %0, %27 : vector<1x16x256xf32>
    %cst_16 = arith.constant dense<0.000000e+00> : vector<1x256xf32>
    %29 = vector.multi_reduction <add>, %28, %cst_16 [1] : vector<1x16x256xf32> to vector<1x256xf32>
    %cst_17 = arith.constant 1.600000e+01 : f32
    %30 = vector.broadcast %cst_17 : f32 to vector<1x256xf32>
    %31 = arith.divf %29, %30 : vector<1x256xf32>
    %cst_18 = arith.constant dense<0xFF800000> : vector<1x256xf32>
    %32 = vector.multi_reduction <maximumf>, %28, %cst_18 [1] : vector<1x16x256xf32> to vector<1x256xf32>
    %33 = tpu.concatenate %31, %32 in 0 : vector<1x256xf32>, vector<1x256xf32> -> vector<2x256xf32>
    %c24 = arith.constant 24 : index
    %c0_19 = arith.constant 0 : index
    %c0_20 = arith.constant 0 : index
    %34 = vector.load %arg6[%c24, %c0_19, %c0_20] : memref<49x2x256xf32, #tpu.memory_space<vmem>>, vector<1x2x256xf32>
    %35 = vector.shape_cast %34 : vector<1x2x256xf32> to vector<2x256xf32>
    %36 = arith.mulf %35, %33 : vector<2x256xf32>
    %c0_21 = arith.constant 0 : index
    %c0_22 = arith.constant 0 : index
    %c0_23 = arith.constant 0 : index
    %37 = vector.load %arg6[%c0_21, %c0_22, %c0_23] : memref<49x2x256xf32, #tpu.memory_space<vmem>>, vector<1x2x256xf32>
    %38 = vector.shape_cast %37 : vector<1x2x256xf32> to vector<2x256xf32>
    %c51_i32 = arith.constant 51 : i32
    %39 = tpu.dynamic_rotate %33 by %c51_i32 dim 1 : vector<2x256xf32>, i32 -> vector<2x256xf32>
    %40 = arith.mulf %38, %39 : vector<2x256xf32>
    %41 = arith.addf %36, %40 : vector<2x256xf32>
    %c1 = arith.constant 1 : index
    %c0_24 = arith.constant 0 : index
    %c0_25 = arith.constant 0 : index
    %42 = vector.load %arg6[%c1, %c0_24, %c0_25] : memref<49x2x256xf32, #tpu.memory_space<vmem>>, vector<1x2x256xf32>
    %43 = vector.shape_cast %42 : vector<1x2x256xf32> to vector<2x256xf32>
    %c50_i32 = arith.constant 50 : i32
    %44 = tpu.dynamic_rotate %33 by %c50_i32 dim 1 : vector<2x256xf32>, i32 -> vector<2x256xf32>
    %45 = arith.mulf %43, %44 : vector<2x256xf32>
    %46 = arith.addf %41, %45 : vector<2x256xf32>
    %c2 = arith.constant 2 : index
    %c0_26 = arith.constant 0 : index
    %c0_27 = arith.constant 0 : index
    %47 = vector.load %arg6[%c2, %c0_26, %c0_27] : memref<49x2x256xf32, #tpu.memory_space<vmem>>, vector<1x2x256xf32>
    %48 = vector.shape_cast %47 : vector<1x2x256xf32> to vector<2x256xf32>
    %c49_i32 = arith.constant 49 : i32
    %49 = tpu.dynamic_rotate %33 by %c49_i32 dim 1 : vector<2x256xf32>, i32 -> vector<2x256xf32>
    %50 = arith.mulf %48, %49 : vector<2x256xf32>
    %51 = arith.addf %46, %50 : vector<2x256xf32>
    %c3 = arith.constant 3 : index
    %c0_28 = arith.constant 0 : index
    %c0_29 = arith.constant 0 : index
    %52 = vector.load %arg6[%c3, %c0_28, %c0_29] : memref<49x2x256xf32, #tpu.memory_space<vmem>>, vector<1x2x256xf32>
    %53 = vector.shape_cast %52 : vector<1x2x256xf32> to vector<2x256xf32>
    %c48_i32 = arith.constant 48 : i32
    %54 = tpu.dynamic_rotate %33 by %c48_i32 dim 1 : vector<2x256xf32>, i32 -> vector<2x256xf32>
    %55 = arith.mulf %53, %54 : vector<2x256xf32>
    %56 = arith.addf %51, %55 : vector<2x256xf32>
    %c4 = arith.constant 4 : index
    %c0_30 = arith.constant 0 : index
    %c0_31 = arith.constant 0 : index
    %57 = vector.load %arg6[%c4, %c0_30, %c0_31] : memref<49x2x256xf32, #tpu.memory_space<vmem>>, vector<1x2x256xf32>
    %58 = vector.shape_cast %57 : vector<1x2x256xf32> to vector<2x256xf32>
    %c47_i32 = arith.constant 47 : i32
    %59 = tpu.dynamic_rotate %33 by %c47_i32 dim 1 : vector<2x256xf32>, i32 -> vector<2x256xf32>
    %60 = arith.mulf %58, %59 : vector<2x256xf32>
    %61 = arith.addf %56, %60 : vector<2x256xf32>
    %c5 = arith.constant 5 : index
    %c0_32 = arith.constant 0 : index
    %c0_33 = arith.constant 0 : index
    %62 = vector.load %arg6[%c5, %c0_32, %c0_33] : memref<49x2x256xf32, #tpu.memory_space<vmem>>, vector<1x2x256xf32>
    %63 = vector.shape_cast %62 : vector<1x2x256xf32> to vector<2x256xf32>
    %c46_i32 = arith.constant 46 : i32
    %64 = tpu.dynamic_rotate %33 by %c46_i32 dim 1 : vector<2x256xf32>, i32 -> vector<2x256xf32>
    %65 = arith.mulf %63, %64 : vector<2x256xf32>
    %66 = arith.addf %61, %65 : vector<2x256xf32>
    %c6 = arith.constant 6 : index
    %c0_34 = arith.constant 0 : index
    %c0_35 = arith.constant 0 : index
    %67 = vector.load %arg6[%c6, %c0_34, %c0_35] : memref<49x2x256xf32, #tpu.memory_space<vmem>>, vector<1x2x256xf32>
    %68 = vector.shape_cast %67 : vector<1x2x256xf32> to vector<2x256xf32>
    %c45_i32 = arith.constant 45 : i32
    %69 = tpu.dynamic_rotate %33 by %c45_i32 dim 1 : vector<2x256xf32>, i32 -> vector<2x256xf32>
    %70 = arith.mulf %68, %69 : vector<2x256xf32>
    %71 = arith.addf %66, %70 : vector<2x256xf32>
    %c7 = arith.constant 7 : index
    %c0_36 = arith.constant 0 : index
    %c0_37 = arith.constant 0 : index
    %72 = vector.load %arg6[%c7, %c0_36, %c0_37] : memref<49x2x256xf32, #tpu.memory_space<vmem>>, vector<1x2x256xf32>
    %73 = vector.shape_cast %72 : vector<1x2x256xf32> to vector<2x256xf32>
    %c35_i32 = arith.constant 35 : i32
    %74 = tpu.dynamic_rotate %33 by %c35_i32 dim 1 : vector<2x256xf32>, i32 -> vector<2x256xf32>
    %75 = arith.mulf %73, %74 : vector<2x256xf32>
    %76 = arith.addf %71, %75 : vector<2x256xf32>
    %c8 = arith.constant 8 : index
    %c0_38 = arith.constant 0 : index
    %c0_39 = arith.constant 0 : index
    %77 = vector.load %arg6[%c8, %c0_38, %c0_39] : memref<49x2x256xf32, #tpu.memory_space<vmem>>, vector<1x2x256xf32>
    %78 = vector.shape_cast %77 : vector<1x2x256xf32> to vector<2x256xf32>
    %c34_i32 = arith.constant 34 : i32
    %79 = tpu.dynamic_rotate %33 by %c34_i32 dim 1 : vector<2x256xf32>, i32 -> vector<2x256xf32>
    %80 = arith.mulf %78, %79 : vector<2x256xf32>
    %81 = arith.addf %76, %80 : vector<2x256xf32>
    %c9 = arith.constant 9 : index
    %c0_40 = arith.constant 0 : index
    %c0_41 = arith.constant 0 : index
    %82 = vector.load %arg6[%c9, %c0_40, %c0_41] : memref<49x2x256xf32, #tpu.memory_space<vmem>>, vector<1x2x256xf32>
    %83 = vector.shape_cast %82 : vector<1x2x256xf32> to vector<2x256xf32>
    %c33_i32 = arith.constant 33 : i32
    %84 = tpu.dynamic_rotate %33 by %c33_i32 dim 1 : vector<2x256xf32>, i32 -> vector<2x256xf32>
    %85 = arith.mulf %83, %84 : vector<2x256xf32>
    %86 = arith.addf %81, %85 : vector<2x256xf32>
    %c10 = arith.constant 10 : index
    %c0_42 = arith.constant 0 : index
    %c0_43 = arith.constant 0 : index
    %87 = vector.load %arg6[%c10, %c0_42, %c0_43] : memref<49x2x256xf32, #tpu.memory_space<vmem>>, vector<1x2x256xf32>
    %88 = vector.shape_cast %87 : vector<1x2x256xf32> to vector<2x256xf32>
    %c32_i32 = arith.constant 32 : i32
    %89 = tpu.dynamic_rotate %33 by %c32_i32 dim 1 : vector<2x256xf32>, i32 -> vector<2x256xf32>
    %90 = arith.mulf %88, %89 : vector<2x256xf32>
    %91 = arith.addf %86, %90 : vector<2x256xf32>
    %c11 = arith.constant 11 : index
    %c0_44 = arith.constant 0 : index
    %c0_45 = arith.constant 0 : index
    %92 = vector.load %arg6[%c11, %c0_44, %c0_45] : memref<49x2x256xf32, #tpu.memory_space<vmem>>, vector<1x2x256xf32>
    %93 = vector.shape_cast %92 : vector<1x2x256xf32> to vector<2x256xf32>
    %c31_i32 = arith.constant 31 : i32
    %94 = tpu.dynamic_rotate %33 by %c31_i32 dim 1 : vector<2x256xf32>, i32 -> vector<2x256xf32>
    %95 = arith.mulf %93, %94 : vector<2x256xf32>
    %96 = arith.addf %91, %95 : vector<2x256xf32>
    %c12 = arith.constant 12 : index
    %c0_46 = arith.constant 0 : index
    %c0_47 = arith.constant 0 : index
    %97 = vector.load %arg6[%c12, %c0_46, %c0_47] : memref<49x2x256xf32, #tpu.memory_space<vmem>>, vector<1x2x256xf32>
    %98 = vector.shape_cast %97 : vector<1x2x256xf32> to vector<2x256xf32>
    %c30_i32 = arith.constant 30 : i32
    %99 = tpu.dynamic_rotate %33 by %c30_i32 dim 1 : vector<2x256xf32>, i32 -> vector<2x256xf32>
    %100 = arith.mulf %98, %99 : vector<2x256xf32>
    %101 = arith.addf %96, %100 : vector<2x256xf32>
    %c13 = arith.constant 13 : index
    %c0_48 = arith.constant 0 : index
    %c0_49 = arith.constant 0 : index
    %102 = vector.load %arg6[%c13, %c0_48, %c0_49] : memref<49x2x256xf32, #tpu.memory_space<vmem>>, vector<1x2x256xf32>
    %103 = vector.shape_cast %102 : vector<1x2x256xf32> to vector<2x256xf32>
    %c29_i32 = arith.constant 29 : i32
    %104 = tpu.dynamic_rotate %33 by %c29_i32 dim 1 : vector<2x256xf32>, i32 -> vector<2x256xf32>
    %105 = arith.mulf %103, %104 : vector<2x256xf32>
    %106 = arith.addf %101, %105 : vector<2x256xf32>
    %c14 = arith.constant 14 : index
    %c0_50 = arith.constant 0 : index
    %c0_51 = arith.constant 0 : index
    %107 = vector.load %arg6[%c14, %c0_50, %c0_51] : memref<49x2x256xf32, #tpu.memory_space<vmem>>, vector<1x2x256xf32>
    %108 = vector.shape_cast %107 : vector<1x2x256xf32> to vector<2x256xf32>
    %c19_i32 = arith.constant 19 : i32
    %109 = tpu.dynamic_rotate %33 by %c19_i32 dim 1 : vector<2x256xf32>, i32 -> vector<2x256xf32>
    %110 = arith.mulf %108, %109 : vector<2x256xf32>
    %111 = arith.addf %106, %110 : vector<2x256xf32>
    %c15 = arith.constant 15 : index
    %c0_52 = arith.constant 0 : index
    %c0_53 = arith.constant 0 : index
    %112 = vector.load %arg6[%c15, %c0_52, %c0_53] : memref<49x2x256xf32, #tpu.memory_space<vmem>>, vector<1x2x256xf32>
    %113 = vector.shape_cast %112 : vector<1x2x256xf32> to vector<2x256xf32>
    %c18_i32 = arith.constant 18 : i32
    %114 = tpu.dynamic_rotate %33 by %c18_i32 dim 1 : vector<2x256xf32>, i32 -> vector<2x256xf32>
    %115 = arith.mulf %113, %114 : vector<2x256xf32>
    %116 = arith.addf %111, %115 : vector<2x256xf32>
    %c16 = arith.constant 16 : index
    %c0_54 = arith.constant 0 : index
    %c0_55 = arith.constant 0 : index
    %117 = vector.load %arg6[%c16, %c0_54, %c0_55] : memref<49x2x256xf32, #tpu.memory_space<vmem>>, vector<1x2x256xf32>
    %118 = vector.shape_cast %117 : vector<1x2x256xf32> to vector<2x256xf32>
    %c17_i32 = arith.constant 17 : i32
    %119 = tpu.dynamic_rotate %33 by %c17_i32 dim 1 : vector<2x256xf32>, i32 -> vector<2x256xf32>
    %120 = arith.mulf %118, %119 : vector<2x256xf32>
    %121 = arith.addf %116, %120 : vector<2x256xf32>
    %c17 = arith.constant 17 : index
    %c0_56 = arith.constant 0 : index
    %c0_57 = arith.constant 0 : index
    %122 = vector.load %arg6[%c17, %c0_56, %c0_57] : memref<49x2x256xf32, #tpu.memory_space<vmem>>, vector<1x2x256xf32>
    %123 = vector.shape_cast %122 : vector<1x2x256xf32> to vector<2x256xf32>
    %c16_i32 = arith.constant 16 : i32
    %124 = tpu.dynamic_rotate %33 by %c16_i32 dim 1 : vector<2x256xf32>, i32 -> vector<2x256xf32>
    %125 = arith.mulf %123, %124 : vector<2x256xf32>
    %126 = arith.addf %121, %125 : vector<2x256xf32>
    %c18 = arith.constant 18 : index
    %c0_58 = arith.constant 0 : index
    %c0_59 = arith.constant 0 : index
    %127 = vector.load %arg6[%c18, %c0_58, %c0_59] : memref<49x2x256xf32, #tpu.memory_space<vmem>>, vector<1x2x256xf32>
    %128 = vector.shape_cast %127 : vector<1x2x256xf32> to vector<2x256xf32>
    %c15_i32 = arith.constant 15 : i32
    %129 = tpu.dynamic_rotate %33 by %c15_i32 dim 1 : vector<2x256xf32>, i32 -> vector<2x256xf32>
    %130 = arith.mulf %128, %129 : vector<2x256xf32>
    %131 = arith.addf %126, %130 : vector<2x256xf32>
    %c19 = arith.constant 19 : index
    %c0_60 = arith.constant 0 : index
    %c0_61 = arith.constant 0 : index
    %132 = vector.load %arg6[%c19, %c0_60, %c0_61] : memref<49x2x256xf32, #tpu.memory_space<vmem>>, vector<1x2x256xf32>
    %133 = vector.shape_cast %132 : vector<1x2x256xf32> to vector<2x256xf32>
    %c14_i32 = arith.constant 14 : i32
    %134 = tpu.dynamic_rotate %33 by %c14_i32 dim 1 : vector<2x256xf32>, i32 -> vector<2x256xf32>
    %135 = arith.mulf %133, %134 : vector<2x256xf32>
    %136 = arith.addf %131, %135 : vector<2x256xf32>
    %c20 = arith.constant 20 : index
    %c0_62 = arith.constant 0 : index
    %c0_63 = arith.constant 0 : index
    %137 = vector.load %arg6[%c20, %c0_62, %c0_63] : memref<49x2x256xf32, #tpu.memory_space<vmem>>, vector<1x2x256xf32>
    %138 = vector.shape_cast %137 : vector<1x2x256xf32> to vector<2x256xf32>
    %c13_i32 = arith.constant 13 : i32
    %139 = tpu.dynamic_rotate %33 by %c13_i32 dim 1 : vector<2x256xf32>, i32 -> vector<2x256xf32>
    %140 = arith.mulf %138, %139 : vector<2x256xf32>
    %141 = arith.addf %136, %140 : vector<2x256xf32>
    %c21 = arith.constant 21 : index
    %c0_64 = arith.constant 0 : index
    %c0_65 = arith.constant 0 : index
    %142 = vector.load %arg6[%c21, %c0_64, %c0_65] : memref<49x2x256xf32, #tpu.memory_space<vmem>>, vector<1x2x256xf32>
    %143 = vector.shape_cast %142 : vector<1x2x256xf32> to vector<2x256xf32>
    %c3_i32 = arith.constant 3 : i32
    %144 = tpu.dynamic_rotate %33 by %c3_i32 dim 1 : vector<2x256xf32>, i32 -> vector<2x256xf32>
    %145 = arith.mulf %143, %144 : vector<2x256xf32>
    %146 = arith.addf %141, %145 : vector<2x256xf32>
    %c22 = arith.constant 22 : index
    %c0_66 = arith.constant 0 : index
    %c0_67 = arith.constant 0 : index
    %147 = vector.load %arg6[%c22, %c0_66, %c0_67] : memref<49x2x256xf32, #tpu.memory_space<vmem>>, vector<1x2x256xf32>
    %148 = vector.shape_cast %147 : vector<1x2x256xf32> to vector<2x256xf32>
    %c2_i32 = arith.constant 2 : i32
    %149 = tpu.dynamic_rotate %33 by %c2_i32 dim 1 : vector<2x256xf32>, i32 -> vector<2x256xf32>
    %150 = arith.mulf %148, %149 : vector<2x256xf32>
    %151 = arith.addf %146, %150 : vector<2x256xf32>
    %c23 = arith.constant 23 : index
    %c0_68 = arith.constant 0 : index
    %c0_69 = arith.constant 0 : index
    %152 = vector.load %arg6[%c23, %c0_68, %c0_69] : memref<49x2x256xf32, #tpu.memory_space<vmem>>, vector<1x2x256xf32>
    %153 = vector.shape_cast %152 : vector<1x2x256xf32> to vector<2x256xf32>
    %c1_i32 = arith.constant 1 : i32
    %154 = tpu.dynamic_rotate %33 by %c1_i32 dim 1 : vector<2x256xf32>, i32 -> vector<2x256xf32>
    %155 = arith.mulf %153, %154 : vector<2x256xf32>
    %156 = arith.addf %151, %155 : vector<2x256xf32>
    %c25 = arith.constant 25 : index
    %c0_70 = arith.constant 0 : index
    %c0_71 = arith.constant 0 : index
    %157 = vector.load %arg6[%c25, %c0_70, %c0_71] : memref<49x2x256xf32, #tpu.memory_space<vmem>>, vector<1x2x256xf32>
    %158 = vector.shape_cast %157 : vector<1x2x256xf32> to vector<2x256xf32>
    %c255_i32 = arith.constant 255 : i32
    %159 = tpu.dynamic_rotate %33 by %c255_i32 dim 1 : vector<2x256xf32>, i32 -> vector<2x256xf32>
    %160 = arith.mulf %158, %159 : vector<2x256xf32>
    %161 = arith.addf %156, %160 : vector<2x256xf32>
    %c26 = arith.constant 26 : index
    %c0_72 = arith.constant 0 : index
    %c0_73 = arith.constant 0 : index
    %162 = vector.load %arg6[%c26, %c0_72, %c0_73] : memref<49x2x256xf32, #tpu.memory_space<vmem>>, vector<1x2x256xf32>
    %163 = vector.shape_cast %162 : vector<1x2x256xf32> to vector<2x256xf32>
    %c254_i32 = arith.constant 254 : i32
    %164 = tpu.dynamic_rotate %33 by %c254_i32 dim 1 : vector<2x256xf32>, i32 -> vector<2x256xf32>
    %165 = arith.mulf %163, %164 : vector<2x256xf32>
    %166 = arith.addf %161, %165 : vector<2x256xf32>
    %c27 = arith.constant 27 : index
    %c0_74 = arith.constant 0 : index
    %c0_75 = arith.constant 0 : index
    %167 = vector.load %arg6[%c27, %c0_74, %c0_75] : memref<49x2x256xf32, #tpu.memory_space<vmem>>, vector<1x2x256xf32>
    %168 = vector.shape_cast %167 : vector<1x2x256xf32> to vector<2x256xf32>
    %c253_i32 = arith.constant 253 : i32
    %169 = tpu.dynamic_rotate %33 by %c253_i32 dim 1 : vector<2x256xf32>, i32 -> vector<2x256xf32>
    %170 = arith.mulf %168, %169 : vector<2x256xf32>
    %171 = arith.addf %166, %170 : vector<2x256xf32>
    %c28 = arith.constant 28 : index
    %c0_76 = arith.constant 0 : index
    %c0_77 = arith.constant 0 : index
    %172 = vector.load %arg6[%c28, %c0_76, %c0_77] : memref<49x2x256xf32, #tpu.memory_space<vmem>>, vector<1x2x256xf32>
    %173 = vector.shape_cast %172 : vector<1x2x256xf32> to vector<2x256xf32>
    %c243_i32 = arith.constant 243 : i32
    %174 = tpu.dynamic_rotate %33 by %c243_i32 dim 1 : vector<2x256xf32>, i32 -> vector<2x256xf32>
    %175 = arith.mulf %173, %174 : vector<2x256xf32>
    %176 = arith.addf %171, %175 : vector<2x256xf32>
    %c29 = arith.constant 29 : index
    %c0_78 = arith.constant 0 : index
    %c0_79 = arith.constant 0 : index
    %177 = vector.load %arg6[%c29, %c0_78, %c0_79] : memref<49x2x256xf32, #tpu.memory_space<vmem>>, vector<1x2x256xf32>
    %178 = vector.shape_cast %177 : vector<1x2x256xf32> to vector<2x256xf32>
    %c242_i32 = arith.constant 242 : i32
    %179 = tpu.dynamic_rotate %33 by %c242_i32 dim 1 : vector<2x256xf32>, i32 -> vector<2x256xf32>
    %180 = arith.mulf %178, %179 : vector<2x256xf32>
    %181 = arith.addf %176, %180 : vector<2x256xf32>
    %c30 = arith.constant 30 : index
    %c0_80 = arith.constant 0 : index
    %c0_81 = arith.constant 0 : index
    %182 = vector.load %arg6[%c30, %c0_80, %c0_81] : memref<49x2x256xf32, #tpu.memory_space<vmem>>, vector<1x2x256xf32>
    %183 = vector.shape_cast %182 : vector<1x2x256xf32> to vector<2x256xf32>
    %c241_i32 = arith.constant 241 : i32
    %184 = tpu.dynamic_rotate %33 by %c241_i32 dim 1 : vector<2x256xf32>, i32 -> vector<2x256xf32>
    %185 = arith.mulf %183, %184 : vector<2x256xf32>
    %186 = arith.addf %181, %185 : vector<2x256xf32>
    %c31 = arith.constant 31 : index
    %c0_82 = arith.constant 0 : index
    %c0_83 = arith.constant 0 : index
    %187 = vector.load %arg6[%c31, %c0_82, %c0_83] : memref<49x2x256xf32, #tpu.memory_space<vmem>>, vector<1x2x256xf32>
    %188 = vector.shape_cast %187 : vector<1x2x256xf32> to vector<2x256xf32>
    %c240_i32 = arith.constant 240 : i32
    %189 = tpu.dynamic_rotate %33 by %c240_i32 dim 1 : vector<2x256xf32>, i32 -> vector<2x256xf32>
    %190 = arith.mulf %188, %189 : vector<2x256xf32>
    %191 = arith.addf %186, %190 : vector<2x256xf32>
    %c32 = arith.constant 32 : index
    %c0_84 = arith.constant 0 : index
    %c0_85 = arith.constant 0 : index
    %192 = vector.load %arg6[%c32, %c0_84, %c0_85] : memref<49x2x256xf32, #tpu.memory_space<vmem>>, vector<1x2x256xf32>
    %193 = vector.shape_cast %192 : vector<1x2x256xf32> to vector<2x256xf32>
    %c239_i32 = arith.constant 239 : i32
    %194 = tpu.dynamic_rotate %33 by %c239_i32 dim 1 : vector<2x256xf32>, i32 -> vector<2x256xf32>
    %195 = arith.mulf %193, %194 : vector<2x256xf32>
    %196 = arith.addf %191, %195 : vector<2x256xf32>
    %c33 = arith.constant 33 : index
    %c0_86 = arith.constant 0 : index
    %c0_87 = arith.constant 0 : index
    %197 = vector.load %arg6[%c33, %c0_86, %c0_87] : memref<49x2x256xf32, #tpu.memory_space<vmem>>, vector<1x2x256xf32>
    %198 = vector.shape_cast %197 : vector<1x2x256xf32> to vector<2x256xf32>
    %c238_i32 = arith.constant 238 : i32
    %199 = tpu.dynamic_rotate %33 by %c238_i32 dim 1 : vector<2x256xf32>, i32 -> vector<2x256xf32>
    %200 = arith.mulf %198, %199 : vector<2x256xf32>
    %201 = arith.addf %196, %200 : vector<2x256xf32>
    %c34 = arith.constant 34 : index
    %c0_88 = arith.constant 0 : index
    %c0_89 = arith.constant 0 : index
    %202 = vector.load %arg6[%c34, %c0_88, %c0_89] : memref<49x2x256xf32, #tpu.memory_space<vmem>>, vector<1x2x256xf32>
    %203 = vector.shape_cast %202 : vector<1x2x256xf32> to vector<2x256xf32>
    %c237_i32 = arith.constant 237 : i32
    %204 = tpu.dynamic_rotate %33 by %c237_i32 dim 1 : vector<2x256xf32>, i32 -> vector<2x256xf32>
    %205 = arith.mulf %203, %204 : vector<2x256xf32>
    %206 = arith.addf %201, %205 : vector<2x256xf32>
    %c35 = arith.constant 35 : index
    %c0_90 = arith.constant 0 : index
    %c0_91 = arith.constant 0 : index
    %207 = vector.load %arg6[%c35, %c0_90, %c0_91] : memref<49x2x256xf32, #tpu.memory_space<vmem>>, vector<1x2x256xf32>
    %208 = vector.shape_cast %207 : vector<1x2x256xf32> to vector<2x256xf32>
    %c227_i32 = arith.constant 227 : i32
    %209 = tpu.dynamic_rotate %33 by %c227_i32 dim 1 : vector<2x256xf32>, i32 -> vector<2x256xf32>
    %210 = arith.mulf %208, %209 : vector<2x256xf32>
    %211 = arith.addf %206, %210 : vector<2x256xf32>
    %c36 = arith.constant 36 : index
    %c0_92 = arith.constant 0 : index
    %c0_93 = arith.constant 0 : index
    %212 = vector.load %arg6[%c36, %c0_92, %c0_93] : memref<49x2x256xf32, #tpu.memory_space<vmem>>, vector<1x2x256xf32>
    %213 = vector.shape_cast %212 : vector<1x2x256xf32> to vector<2x256xf32>
    %c226_i32 = arith.constant 226 : i32
    %214 = tpu.dynamic_rotate %33 by %c226_i32 dim 1 : vector<2x256xf32>, i32 -> vector<2x256xf32>
    %215 = arith.mulf %213, %214 : vector<2x256xf32>
    %216 = arith.addf %211, %215 : vector<2x256xf32>
    %c37 = arith.constant 37 : index
    %c0_94 = arith.constant 0 : index
    %c0_95 = arith.constant 0 : index
    %217 = vector.load %arg6[%c37, %c0_94, %c0_95] : memref<49x2x256xf32, #tpu.memory_space<vmem>>, vector<1x2x256xf32>
    %218 = vector.shape_cast %217 : vector<1x2x256xf32> to vector<2x256xf32>
    %c225_i32 = arith.constant 225 : i32
    %219 = tpu.dynamic_rotate %33 by %c225_i32 dim 1 : vector<2x256xf32>, i32 -> vector<2x256xf32>
    %220 = arith.mulf %218, %219 : vector<2x256xf32>
    %221 = arith.addf %216, %220 : vector<2x256xf32>
    %c38 = arith.constant 38 : index
    %c0_96 = arith.constant 0 : index
    %c0_97 = arith.constant 0 : index
    %222 = vector.load %arg6[%c38, %c0_96, %c0_97] : memref<49x2x256xf32, #tpu.memory_space<vmem>>, vector<1x2x256xf32>
    %223 = vector.shape_cast %222 : vector<1x2x256xf32> to vector<2x256xf32>
    %c224_i32 = arith.constant 224 : i32
    %224 = tpu.dynamic_rotate %33 by %c224_i32 dim 1 : vector<2x256xf32>, i32 -> vector<2x256xf32>
    %225 = arith.mulf %223, %224 : vector<2x256xf32>
    %226 = arith.addf %221, %225 : vector<2x256xf32>
    %c39 = arith.constant 39 : index
    %c0_98 = arith.constant 0 : index
    %c0_99 = arith.constant 0 : index
    %227 = vector.load %arg6[%c39, %c0_98, %c0_99] : memref<49x2x256xf32, #tpu.memory_space<vmem>>, vector<1x2x256xf32>
    %228 = vector.shape_cast %227 : vector<1x2x256xf32> to vector<2x256xf32>
    %c223_i32 = arith.constant 223 : i32
    %229 = tpu.dynamic_rotate %33 by %c223_i32 dim 1 : vector<2x256xf32>, i32 -> vector<2x256xf32>
    %230 = arith.mulf %228, %229 : vector<2x256xf32>
    %231 = arith.addf %226, %230 : vector<2x256xf32>
    %c40 = arith.constant 40 : index
    %c0_100 = arith.constant 0 : index
    %c0_101 = arith.constant 0 : index
    %232 = vector.load %arg6[%c40, %c0_100, %c0_101] : memref<49x2x256xf32, #tpu.memory_space<vmem>>, vector<1x2x256xf32>
    %233 = vector.shape_cast %232 : vector<1x2x256xf32> to vector<2x256xf32>
    %c222_i32 = arith.constant 222 : i32
    %234 = tpu.dynamic_rotate %33 by %c222_i32 dim 1 : vector<2x256xf32>, i32 -> vector<2x256xf32>
    %235 = arith.mulf %233, %234 : vector<2x256xf32>
    %236 = arith.addf %231, %235 : vector<2x256xf32>
    %c41 = arith.constant 41 : index
    %c0_102 = arith.constant 0 : index
    %c0_103 = arith.constant 0 : index
    %237 = vector.load %arg6[%c41, %c0_102, %c0_103] : memref<49x2x256xf32, #tpu.memory_space<vmem>>, vector<1x2x256xf32>
    %238 = vector.shape_cast %237 : vector<1x2x256xf32> to vector<2x256xf32>
    %c221_i32 = arith.constant 221 : i32
    %239 = tpu.dynamic_rotate %33 by %c221_i32 dim 1 : vector<2x256xf32>, i32 -> vector<2x256xf32>
    %240 = arith.mulf %238, %239 : vector<2x256xf32>
    %241 = arith.addf %236, %240 : vector<2x256xf32>
    %c42 = arith.constant 42 : index
    %c0_104 = arith.constant 0 : index
    %c0_105 = arith.constant 0 : index
    %242 = vector.load %arg6[%c42, %c0_104, %c0_105] : memref<49x2x256xf32, #tpu.memory_space<vmem>>, vector<1x2x256xf32>
    %243 = vector.shape_cast %242 : vector<1x2x256xf32> to vector<2x256xf32>
    %c211_i32 = arith.constant 211 : i32
    %244 = tpu.dynamic_rotate %33 by %c211_i32 dim 1 : vector<2x256xf32>, i32 -> vector<2x256xf32>
    %245 = arith.mulf %243, %244 : vector<2x256xf32>
    %246 = arith.addf %241, %245 : vector<2x256xf32>
    %c43 = arith.constant 43 : index
    %c0_106 = arith.constant 0 : index
    %c0_107 = arith.constant 0 : index
    %247 = vector.load %arg6[%c43, %c0_106, %c0_107] : memref<49x2x256xf32, #tpu.memory_space<vmem>>, vector<1x2x256xf32>
    %248 = vector.shape_cast %247 : vector<1x2x256xf32> to vector<2x256xf32>
    %c210_i32 = arith.constant 210 : i32
    %249 = tpu.dynamic_rotate %33 by %c210_i32 dim 1 : vector<2x256xf32>, i32 -> vector<2x256xf32>
    %250 = arith.mulf %248, %249 : vector<2x256xf32>
    %251 = arith.addf %246, %250 : vector<2x256xf32>
    %c44 = arith.constant 44 : index
    %c0_108 = arith.constant 0 : index
    %c0_109 = arith.constant 0 : index
    %252 = vector.load %arg6[%c44, %c0_108, %c0_109] : memref<49x2x256xf32, #tpu.memory_space<vmem>>, vector<1x2x256xf32>
    %253 = vector.shape_cast %252 : vector<1x2x256xf32> to vector<2x256xf32>
    %c209_i32 = arith.constant 209 : i32
    %254 = tpu.dynamic_rotate %33 by %c209_i32 dim 1 : vector<2x256xf32>, i32 -> vector<2x256xf32>
    %255 = arith.mulf %253, %254 : vector<2x256xf32>
    %256 = arith.addf %251, %255 : vector<2x256xf32>
    %c45 = arith.constant 45 : index
    %c0_110 = arith.constant 0 : index
    %c0_111 = arith.constant 0 : index
    %257 = vector.load %arg6[%c45, %c0_110, %c0_111] : memref<49x2x256xf32, #tpu.memory_space<vmem>>, vector<1x2x256xf32>
    %258 = vector.shape_cast %257 : vector<1x2x256xf32> to vector<2x256xf32>
    %c208_i32 = arith.constant 208 : i32
    %259 = tpu.dynamic_rotate %33 by %c208_i32 dim 1 : vector<2x256xf32>, i32 -> vector<2x256xf32>
    %260 = arith.mulf %258, %259 : vector<2x256xf32>
    %261 = arith.addf %256, %260 : vector<2x256xf32>
    %c46 = arith.constant 46 : index
    %c0_112 = arith.constant 0 : index
    %c0_113 = arith.constant 0 : index
    %262 = vector.load %arg6[%c46, %c0_112, %c0_113] : memref<49x2x256xf32, #tpu.memory_space<vmem>>, vector<1x2x256xf32>
    %263 = vector.shape_cast %262 : vector<1x2x256xf32> to vector<2x256xf32>
    %c207_i32 = arith.constant 207 : i32
    %264 = tpu.dynamic_rotate %33 by %c207_i32 dim 1 : vector<2x256xf32>, i32 -> vector<2x256xf32>
    %265 = arith.mulf %263, %264 : vector<2x256xf32>
    %266 = arith.addf %261, %265 : vector<2x256xf32>
    %c47 = arith.constant 47 : index
    %c0_114 = arith.constant 0 : index
    %c0_115 = arith.constant 0 : index
    %267 = vector.load %arg6[%c47, %c0_114, %c0_115] : memref<49x2x256xf32, #tpu.memory_space<vmem>>, vector<1x2x256xf32>
    %268 = vector.shape_cast %267 : vector<1x2x256xf32> to vector<2x256xf32>
    %c206_i32 = arith.constant 206 : i32
    %269 = tpu.dynamic_rotate %33 by %c206_i32 dim 1 : vector<2x256xf32>, i32 -> vector<2x256xf32>
    %270 = arith.mulf %268, %269 : vector<2x256xf32>
    %271 = arith.addf %266, %270 : vector<2x256xf32>
    %c48 = arith.constant 48 : index
    %c0_116 = arith.constant 0 : index
    %c0_117 = arith.constant 0 : index
    %272 = vector.load %arg6[%c48, %c0_116, %c0_117] : memref<49x2x256xf32, #tpu.memory_space<vmem>>, vector<1x2x256xf32>
    %273 = vector.shape_cast %272 : vector<1x2x256xf32> to vector<2x256xf32>
    %c205_i32 = arith.constant 205 : i32
    %274 = tpu.dynamic_rotate %33 by %c205_i32 dim 1 : vector<2x256xf32>, i32 -> vector<2x256xf32>
    %275 = arith.mulf %273, %274 : vector<2x256xf32>
    %276 = arith.addf %271, %275 : vector<2x256xf32>
    %277 = vector.extract_strided_slice %276 {offsets = [0, 0], sizes = [1, 256], strides = [1, 1]} : vector<2x256xf32> to vector<1x256xf32>
    %278 = vector.extract_strided_slice %276 {offsets = [1, 0], sizes = [1, 256], strides = [1, 1]} : vector<2x256xf32> to vector<1x256xf32>
    %279 = arith.addf %277, %278 : vector<1x256xf32>
    %c0_118 = arith.constant 0 : index
    %280 = memref.load %arg7[%c0_118] : memref<1xf32, #tpu.memory_space<smem>>
    %281 = vector.broadcast %280 : f32 to vector<1x256xf32>
    %282 = arith.addf %279, %281 : vector<1x256xf32>
    %283 = arith.negf %282 : vector<1x256xf32>
    %284 = math.exp %283 : vector<1x256xf32>
    %cst_119 = arith.constant 1.000000e+00 : f32
    %285 = vector.broadcast %cst_119 : f32 to vector<1x256xf32>
    %286 = arith.addf %285, %284 : vector<1x256xf32>
    %287 = arith.divf %285, %286 : vector<1x256xf32>
    %288 = vector.shape_cast %287 : vector<1x256xf32> to vector<1x1x256xf32>
    %289 = vector.broadcast %288 : vector<1x1x256xf32> to vector<1x16x256xf32>
    %290 = arith.mulf %28, %289 : vector<1x16x256xf32>
    %c0_120 = arith.constant 0 : index
    %c0_121 = arith.constant 0 : index
    %c0_122 = arith.constant 0 : index
    %291 = vector.load %arg8[%c0_120, %c0_121, %c0_122] : memref<1x16x256xf32, #tpu.memory_space<vmem>>, vector<1x16x256xf32>
    tpu.vector_store %arg8[%c0_120, %c0_121, %c0_122], %290 {strides = array<i32>} : memref<1x16x256xf32, #tpu.memory_space<vmem>>, vector<1x16x256xf32>,
    return
  }
  func.func @transform_0(%arg0: i32) -> (i32, i32, i32) {
    %c0_i32 = arith.constant 0 : i32
    %c0_i32_0 = arith.constant 0 : i32
    %c0_i32_1 = arith.constant 0 : i32
    return %arg0, %c0_i32, %c0_i32_0 : i32, i32, i32
  }
  func.func @transform_1(%arg0: i32) -> (i32, i32) {
    %c0_i32 = arith.constant 0 : i32
    %c0_i32_0 = arith.constant 0 : i32
    %c0_i32_1 = arith.constant 0 : i32
    return %c0_i32, %c0_i32_0 : i32, i32
  }
  func.func @transform_2(%arg0: i32) -> (i32, i32) {
    %c0_i32 = arith.constant 0 : i32
    %c0_i32_0 = arith.constant 0 : i32
    %c0_i32_1 = arith.constant 0 : i32
    return %c0_i32, %c0_i32_0 : i32, i32
  }
  func.func @transform_3(%arg0: i32) -> (i32, i32) {
    %c0_i32 = arith.constant 0 : i32
    %c0_i32_0 = arith.constant 0 : i32
    %c0_i32_1 = arith.constant 0 : i32
    return %c0_i32, %c0_i32_0 : i32, i32
  }
  func.func @transform_4(%arg0: i32) -> (i32, i32) {
    %c0_i32 = arith.constant 0 : i32
    %c0_i32_0 = arith.constant 0 : i32
    %c0_i32_1 = arith.constant 0 : i32
    return %c0_i32, %c0_i32_0 : i32, i32
  }
  func.func @transform_5(%arg0: i32) -> (i32, i32, i32) {
    %c0_i32 = arith.constant 0 : i32
    %c0_i32_0 = arith.constant 0 : i32
    %c0_i32_1 = arith.constant 0 : i32
    %c0_i32_2 = arith.constant 0 : i32
    return %c0_i32, %c0_i32_0, %c0_i32_1 : i32, i32, i32
  }
  func.func @transform_6(%arg0: i32) -> i32 {
    %c0_i32 = arith.constant 0 : i32
    %c0_i32_0 = arith.constant 0 : i32
    return %c0_i32 : i32
  }
  func.func @transform_7(%arg0: i32) -> (i32, i32, i32) {
    %c0_i32 = arith.constant 0 : i32
    %c0_i32_0 = arith.constant 0 : i32
    %c0_i32_1 = arith.constant 0 : i32
    return %arg0, %c0_i32, %c0_i32_0 : i32, i32, i32
  }
}

</mosaic_0001>

<llo_original>
// kernel: tpu_custom_call.1
$region0: #{tpu_custom_call.1}
  #allocation0 [shape = 'u32[]', space=smem, size = 0x4, offset = 0x4, fixed_abs, tag = 'smem constant byte address 0x4 - core index']
  #allocation1 [shape = 'u32[72,128]{1,0:T(1,128)}', space=vmem, size = 0x9000, scoped, tag = 'internal scratch']
  #allocation2 [shape = 'f32[1]{0:T(128)S(6)}', space=smem, size = 0x200, scoped, tag = 'scoped memory for tpu_custom_call.1']
  %s0 = inlined_call_operand.hbm [shape: f32[2,16,256], index: 0, kind: input, shape index: {}]
  %s1 = inlined_call_operand.vmem [shape: f32[16,2], index: 1, kind: input, shape index: {}]
  %s2 = inlined_call_operand.vmem [shape: f32[1,2], index: 2, kind: input, shape index: {}]
  %s3 = inlined_call_operand.vmem [shape: f32[2,16], index: 3, kind: input, shape index: {}]
  %s4 = inlined_call_operand.vmem [shape: f32[1,16], index: 4, kind: input, shape index: {}]
  %s5 = inlined_call_operand.hbm [shape: f32[49,2,256], index: 5, kind: input, shape index: {}]
  %s6 = inlined_call_operand.<no memory space> [shape: f32[1], index: 6, kind: input, shape index: {}]
  %s7 = inlined_call_operand.hbm [shape: f32[2,16,256], index: 7, kind: output, shape index: {}]
  %s8 = sld [smem:[#allocation0]]
  $region69: #{tpu_custom_call.1} parent=0
    _
  %s10 = ssub.s32 1, %s8
  %s11 = scalar_select 0, %s10, %s8
  %12 = sst [smem:[#allocation2]] %s6
  $region1: #{tpu_custom_call.1} parent=0
    #allocation3 [shape = 'u8[32768]{0}', space=vmem, size = 0x8000, scoped, tag = 'input window, operand 0']
    #allocation4 [shape = 's32[2]{0}', space=sflag, size = 0x8, scoped, tag = 'scoped memory for tpu_custom_call.1']
    #allocation5 [shape = 's32[2]{0}', space=sflag, size = 0x8, scoped, tag = 'scoped memory for tpu_custom_call.1']
    #allocation6 [shape = 'u8[100352]{0}', space=vmem, size = 0x18800, scoped, tag = 'input window, operand 5, single buffered']
    #allocation7 [shape = 's32[1]{0}', space=sflag, size = 0x4, scoped, tag = 'scoped memory for tpu_custom_call.1']
    #allocation8 [shape = 'u8[32768]{0}', space=vmem, size = 0x8000, scoped, tag = 'output window, operand 0']
    %13 = vsyncpa [#allocation4], 0
    %s14 = scalar_lea.sflag [#allocation4], 1
    %15 = vsyncpa %s14, 0
    %16 = vsyncpa [#allocation7], 0
    %17 = vsyncpa [#allocation5], 0
    %s18 = scalar_lea.sflag [#allocation5], 1
    %19 = vsyncpa %s18, 0
    loop: start=0, step=1, limit=4
    $region2: #{tpu_custom_call.1} parent=1 // loop_pre_header
      _
    $region3: #{tpu_custom_call.1} parent=1 // loop_header
      %s21 = sphi 0, %s25
      %p22 = scmp.ge.s32.totalorder %s21, 4
      %s31 = sphi 0, %s33
      %s34 = sphi 0, %s31
      %s35 = sphi 0, %s34
      %s51 = sphi 0, %s35
      %s55 = sphi 0, %s55
      %s57 = sphi 0, %s55
      %s58 = sphi 0, %s57
      %s72 = sphi 0, %s58
      %s76 = sphi 0, %s76
      %s78 = sphi 0, %s76
      %s79 = sphi 0, %s78
      %s93 = sphi 0, %s79
      %s97 = sphi 0, %s97
      %s99 = sphi 0, %s97
      %s100 = sphi 0, %s99
      %s114 = sphi 0, %s100
      %s118 = sphi 0, %s118
      %s120 = sphi 0, %s118
      %s121 = sphi 0, %s120
      %s135 = sphi 0, %s121
      %s139 = sphi 0, %s139
      %s141 = sphi 0, %s139
      %s142 = sphi 0, %s141
      %s156 = sphi 0, %s142
      %s160 = sphi 0, %s160
      %s162 = sphi 0, %s160
      %s163 = sphi 0, %s162
      %s177 = sphi 0, %s163
      %s183 = sphi 0, %s185
      %s186 = sphi 0, %s183
      %s187 = sphi 0, %s186
      %s203 = sphi 0, %s187
    $region4: #{tpu_custom_call.1} parent=1 // loop_header_branch
      %24 = sbr.rel (%p22) target = $region8
    $region5: #{tpu_custom_call.1} parent=1 // loop_body
      %s26 = ssub.s32 %s21, 1
      %s27 = ssub.s32 %s21, 2
      %s28 = sadd.s32 %s21, 1
      %s29 = ssub.s32 %s21, %s28
      %p30 = scmp.eq.s32.totalorder %s29, 0
      %s32 = sadd.s32 %s31, 1
      %s33 = scalar_select %p30, %s31, %s32
      %p36 = pneg %p30
      %p37 = scmp.eq.s32.totalorder %s21, 1
      %p38 = por %p36, %p37
      %p39 = scmp.ne.s32.totalorder %s31, %s34
      %p40 = scmp.eq.s32.totalorder %s21, 0
      %p41 = por %p39, %p40
      %p42 = scmp.ne.s32.totalorder %s31, %s34
      %p43 = scmp.eq.s32.totalorder %s26, 1
      %p44 = por %p42, %p43
      %p45 = scmp.ne.s32.totalorder %s34, %s35
      %p46 = scmp.eq.s32.totalorder %s26, 0
      %p47 = por %p45, %p46
      %p48 = scmp.ne.s32.totalorder %s34, %s35
      %p49 = scmp.eq.s32.totalorder %s27, 1
      %p50 = por %p48, %p49
      %p52 = scmp.ne.s32.totalorder %s35, %s51
      %p53 = scmp.eq.s32.totalorder %s27, 0
      %p54 = por %p52, %p53
      %s56 = sadd.s32 %s55, 1
      %p59 = scmp.eq.s32.totalorder %s21, 1
      %p60 = scmp.ne.s32.totalorder %s55, %s57
      %p61 = scmp.eq.s32.totalorder %s21, 0
      %p62 = por %p60, %p61
      %p63 = scmp.ne.s32.totalorder %s55, %s57
      %p64 = scmp.eq.s32.totalorder %s26, 1
      %p65 = por %p63, %p64
      %p66 = scmp.ne.s32.totalorder %s57, %s58
      %p67 = scmp.eq.s32.totalorder %s26, 0
      %p68 = por %p66, %p67
      %p69 = scmp.ne.s32.totalorder %s57, %s58
      %p70 = scmp.eq.s32.totalorder %s27, 1
      %p71 = por %p69, %p70
      %p73 = scmp.ne.s32.totalorder %s58, %s72
      %p74 = scmp.eq.s32.totalorder %s27, 0
      %p75 = por %p73, %p74
      %s77 = sadd.s32 %s76, 1
      %p80 = scmp.eq.s32.totalorder %s21, 1
      %p81 = scmp.ne.s32.totalorder %s76, %s78
      %p82 = scmp.eq.s32.totalorder %s21, 0
      %p83 = por %p81, %p82
      %p84 = scmp.ne.s32.totalorder %s76, %s78
      %p85 = scmp.eq.s32.totalorder %s26, 1
      %p86 = por %p84, %p85
      %p87 = scmp.ne.s32.totalorder %s78, %s79
      %p88 = scmp.eq.s32.totalorder %s26, 0
      %p89 = por %p87, %p88
      %p90 = scmp.ne.s32.totalorder %s78, %s79
      %p91 = scmp.eq.s32.totalorder %s27, 1
      %p92 = por %p90, %p91
      %p94 = scmp.ne.s32.totalorder %s79, %s93
      %p95 = scmp.eq.s32.totalorder %s27, 0
      %p96 = por %p94, %p95
      %s98 = sadd.s32 %s97, 1
      %p101 = scmp.eq.s32.totalorder %s21, 1
      %p102 = scmp.ne.s32.totalorder %s97, %s99
      %p103 = scmp.eq.s32.totalorder %s21, 0
      %p104 = por %p102, %p103
      %p105 = scmp.ne.s32.totalorder %s97, %s99
      %p106 = scmp.eq.s32.totalorder %s26, 1
      %p107 = por %p105, %p106
      %p108 = scmp.ne.s32.totalorder %s99, %s100
      %p109 = scmp.eq.s32.totalorder %s26, 0
      %p110 = por %p108, %p109
      %p111 = scmp.ne.s32.totalorder %s99, %s100
      %p112 = scmp.eq.s32.totalorder %s27, 1
      %p113 = por %p111, %p112
      %p115 = scmp.ne.s32.totalorder %s100, %s114
      %p116 = scmp.eq.s32.totalorder %s27, 0
      %p117 = por %p115, %p116
      %s119 = sadd.s32 %s118, 1
      %p122 = scmp.eq.s32.totalorder %s21, 1
      %p123 = scmp.ne.s32.totalorder %s118, %s120
      %p124 = scmp.eq.s32.totalorder %s21, 0
      %p125 = por %p123, %p124
      %p126 = scmp.ne.s32.totalorder %s118, %s120
      %p127 = scmp.eq.s32.totalorder %s26, 1
      %p128 = por %p126, %p127
      %p129 = scmp.ne.s32.totalorder %s120, %s121
      %p130 = scmp.eq.s32.totalorder %s26, 0
      %p131 = por %p129, %p130
      %p132 = scmp.ne.s32.totalorder %s120, %s121
      %p133 = scmp.eq.s32.totalorder %s27, 1
      %p134 = por %p132, %p133
      %p136 = scmp.ne.s32.totalorder %s121, %s135
      %p137 = scmp.eq.s32.totalorder %s27, 0
      %p138 = por %p136, %p137
      %s140 = sadd.s32 %s139, 1
      %p143 = scmp.eq.s32.totalorder %s21, 1
      %p144 = scmp.ne.s32.totalorder %s139, %s141
      %p145 = scmp.eq.s32.totalorder %s21, 0
      %p146 = por %p144, %p145
      %p147 = scmp.ne.s32.totalorder %s139, %s141
      %p148 = scmp.eq.s32.totalorder %s26, 1
      %p149 = por %p147, %p148
      %p150 = scmp.ne.s32.totalorder %s141, %s142
      %p151 = scmp.eq.s32.totalorder %s26, 0
      %p152 = por %p150, %p151
      %p153 = scmp.ne.s32.totalorder %s141, %s142
      %p154 = scmp.eq.s32.totalorder %s27, 1
      %p155 = por %p153, %p154
      %p157 = scmp.ne.s32.totalorder %s142, %s156
      %p158 = scmp.eq.s32.totalorder %s27, 0
      %p159 = por %p157, %p158
      %s161 = sadd.s32 %s160, 1
      %p164 = scmp.eq.s32.totalorder %s21, 1
      %p165 = scmp.ne.s32.totalorder %s160, %s162
      %p166 = scmp.eq.s32.totalorder %s21, 0
      %p167 = por %p165, %p166
      %p168 = scmp.ne.s32.totalorder %s160, %s162
      %p169 = scmp.eq.s32.totalorder %s26, 1
      %p170 = por %p168, %p169
      %p171 = scmp.ne.s32.totalorder %s162, %s163
      %p172 = scmp.eq.s32.totalorder %s26, 0
      %p173 = por %p171, %p172
      %p174 = scmp.ne.s32.totalorder %s162, %s163
      %p175 = scmp.eq.s32.totalorder %s27, 1
      %p176 = por %p174, %p175
      %p178 = scmp.ne.s32.totalorder %s163, %s177
      %p179 = scmp.eq.s32.totalorder %s27, 0
      %p180 = por %p178, %p179
      %s181 = ssub.s32 %s21, %s28
      %p182 = scmp.eq.s32.totalorder %s181, 0
      %s184 = sadd.s32 %s183, 1
      %s185 = scalar_select %p182, %s183, %s184
      %p188 = pneg %p182
      %p189 = scmp.eq.s32.totalorder %s21, 1
      %p190 = por %p188, %p189
      %p191 = scmp.ne.s32.totalorder %s183, %s186
      %p192 = scmp.eq.s32.totalorder %s21, 0
      %p193 = por %p191, %p192
      %p194 = scmp.ne.s32.totalorder %s183, %s186
      %p195 = scmp.eq.s32.totalorder %s26, 1
      %p196 = por %p194, %p195
      %p197 = scmp.ne.s32.totalorder %s186, %s187
      %p198 = scmp.eq.s32.totalorder %s26, 0
      %p199 = por %p197, %p198
      %p200 = scmp.ne.s32.totalorder %s186, %s187
      %p201 = scmp.eq.s32.totalorder %s27, 1
      %p202 = por %p200, %p201
      %p204 = scmp.ne.s32.totalorder %s187, %s203
      %p205 = scmp.eq.s32.totalorder %s27, 0
      %p206 = por %p204, %p205
      %p207 = scmp.le.s32.totalorder 1, %s21
      %p208 = scmp.lt.s32.totalorder %s21, 3
      %p209 = pnand %p207, %p208
      %p210 = pneg %p209
      // Predicated region
      $region9: #{tpu_custom_call.1} parent=5 // pred_check
        _
      $region10: #{tpu_custom_call.1} parent=5 // pred_check_branch
        %212 = sbr.rel (%p209) target = $region12
      $region11: #{tpu_custom_call.1} parent=5 // pred_region
        %s213 = ssub.s32 %s21, 1
        // Predicated region
        $region13: #{tpu_custom_call.1} parent=11 // pred_check
          %p214 = pneg %p68
        $region14: #{tpu_custom_call.1} parent=11 // pred_check_branch
          %216 = sbr.rel (%p214) target = $region16
        $region15: #{tpu_custom_call.1} parent=11 // pred_region
          _
        $region16: #{tpu_custom_call.1} parent=11 // pred_fallthru
          _
        // Predicated region
        $region17: #{tpu_custom_call.1} parent=11 // pred_check
          %p217 = pneg %p89
        $region18: #{tpu_custom_call.1} parent=11 // pred_check_branch
          %219 = sbr.rel (%p217) target = $region20
        $region19: #{tpu_custom_call.1} parent=11 // pred_region
          _
        $region20: #{tpu_custom_call.1} parent=11 // pred_fallthru
          _
        // Predicated region
        $region21: #{tpu_custom_call.1} parent=11 // pred_check
          %p220 = pneg %p110
        $region22: #{tpu_custom_call.1} parent=11 // pred_check_branch
          %222 = sbr.rel (%p220) target = $region24
        $region23: #{tpu_custom_call.1} parent=11 // pred_region
          _
        $region24: #{tpu_custom_call.1} parent=11 // pred_fallthru
          _
        // Predicated region
        $region25: #{tpu_custom_call.1} parent=11 // pred_check
          %p223 = pneg %p131
        $region26: #{tpu_custom_call.1} parent=11 // pred_check_branch
          %225 = sbr.rel (%p223) target = $region28
        $region27: #{tpu_custom_call.1} parent=11 // pred_region
          _
        $region28: #{tpu_custom_call.1} parent=11 // pred_fallthru
          _
        // Predicated region
        $region29: #{tpu_custom_call.1} parent=11 // pred_check
          %p226 = pneg %p152
        $region30: #{tpu_custom_call.1} parent=11 // pred_check_branch
          %228 = sbr.rel (%p226) target = $region32
        $region31: #{tpu_custom_call.1} parent=11 // pred_region
          %230 = vsyncadd [#allocation7], 0
          %s231 = sshll.u32 %s5, 4
          %s232 = int_to_ptr.hbm [resolvable:$true] %s231
          %s233 = sshll.u32 [#allocation6], 4
          %s234 = int_to_ptr.vmem [resolvable:$true] %s233
          %239 = dma.hbm_to_vmem [thread:$0]  %s232, 3136, %s234, [#allocation7], 64, 64, 4
        $region32: #{tpu_custom_call.1} parent=11 // pred_fallthru
          _
        // Predicated region
        $region33: #{tpu_custom_call.1} parent=11 // pred_check
          %p240 = pneg %p173
        $region34: #{tpu_custom_call.1} parent=11 // pred_check_branch
          %242 = sbr.rel (%p240) target = $region36
        $region35: #{tpu_custom_call.1} parent=11 // pred_region
          _
        $region36: #{tpu_custom_call.1} parent=11 // pred_fallthru
          _
      $region12: #{tpu_custom_call.1} parent=5 // pred_fallthru
        _
      %p243 = scmp.lt.s32.totalorder %s21, 2
      // Predicated region
      $region37: #{tpu_custom_call.1} parent=5 // pred_check
        %p244 = pneg %p243
      $region38: #{tpu_custom_call.1} parent=5 // pred_check_branch
        %246 = sbr.rel (%p244) target = $region40
      $region39: #{tpu_custom_call.1} parent=5 // pred_region
        // Predicated region
        $region41: #{tpu_custom_call.1} parent=39 // pred_check
          %p247 = pneg %p41
        $region42: #{tpu_custom_call.1} parent=39 // pred_check_branch
          %249 = sbr.rel (%p247) target = $region44
        $region43: #{tpu_custom_call.1} parent=39 // pred_region
          %s250 = sand.u32 %s31, 1
          %s251 = scalar_lea.sflag [#allocation4], %s250
          %s252 = sand.u32 %s31, 1
          %s253 = smul.addr %s252, 32
          %s254 = scalar_lea.vmem [#allocation3], %s253
          %256 = vsyncadd %s251, 0
          %s257 = smul.addr %s21, 4
          %s258 = smul.addr %s257, 8
          %s259 = scalar_lea.hbm %s0, %s258
          %s260 = sshll.u32 %s259, 4
          %s261 = int_to_ptr.hbm [resolvable:$true] %s260
          %s262 = sshll.u32 %s254, 4
          %s263 = int_to_ptr.vmem [resolvable:$true] %s262
          %268 = dma.hbm_to_vmem [thread:$0]  %s261, 512, %s263, %s251, 256, 256, 16
        $region44: #{tpu_custom_call.1} parent=39 // pred_fallthru
          _
      $region40: #{tpu_custom_call.1} parent=5 // pred_fallthru
        _
      %p269 = scmp.le.s32.totalorder 1, %s21
      %p270 = scmp.lt.s32.totalorder %s21, 3
      %p271 = pnand %p269, %p270
      %p272 = pneg %p271
      // Predicated region
      $region45: #{tpu_custom_call.1} parent=5 // pred_check
        _
      $region46: #{tpu_custom_call.1} parent=5 // pred_check_branch
        %274 = sbr.rel (%p271) target = $region48
      $region47: #{tpu_custom_call.1} parent=5 // pred_region
        %s275 = ssub.s32 %s21, 1
        %s276 = sand.u32 %s34, 1
        %s277 = scalar_lea.sflag [#allocation4], %s276
        %s278 = sand.u32 %s34, 1
        %s279 = smul.addr %s278, 32
        %s280 = scalar_lea.vmem [#allocation3], %s279
        // Predicated region
        $region49: #{tpu_custom_call.1} parent=47 // pred_check
          %p281 = pneg %p47
        $region50: #{tpu_custom_call.1} parent=47 // pred_check_branch
          %283 = sbr.rel (%p281) target = $region52
        $region51: #{tpu_custom_call.1} parent=47 // pred_region
          %285 = dma.done %s277, 512
        $region52: #{tpu_custom_call.1} parent=47 // pred_fallthru
          _
        // Predicated region
        $region53: #{tpu_custom_call.1} parent=47 // pred_check
          %p286 = pneg %p152
        $region54: #{tpu_custom_call.1} parent=47 // pred_check_branch
          %288 = sbr.rel (%p286) target = $region56
        $region55: #{tpu_custom_call.1} parent=47 // pred_region
          %290 = dma.done [#allocation7], 3136
        $region56: #{tpu_custom_call.1} parent=47 // pred_fallthru
          _
        %s291 = sand.u32 %s34, 1
        %s292 = scalar_lea.sflag [#allocation4], %s291
        %s293 = sand.u32 %s34, 1
        %s294 = smul.addr %s293, 32
        %s295 = scalar_lea.vmem [#allocation3], %s294
        %p296 = pneg %p47
        %p297 = pneg %p44
        %p298 = pneg %p68
        %p299 = pneg %p65
        %p300 = pneg %p89
        %p301 = pneg %p86
        %p302 = pneg %p110
        %p303 = pneg %p107
        %p304 = pneg %p131
        %p305 = pneg %p128
        %p306 = pneg %p152
        %p307 = pneg %p149
        %p308 = pneg %p173
        %p309 = pneg %p170
        %p310 = pneg %p199
        %p311 = pneg %p196
        %s312 = sand.u32 %s186, 1
        %s313 = scalar_lea.sflag [#allocation5], %s312
        %s314 = sand.u32 %s186, 1
        %s315 = smul.addr %s314, 32
        %s316 = scalar_lea.vmem [#allocation8], %s315
        %v317 = vld [vmem:[%s280] sm:$0xff]
        %v318 = vld [vmem:[%s280 + $0x8] sm:$0xff]
        %v319 = vld [vmem:[%s280 + $0x10] sm:$0xff]
        %v320 = vld [vmem:[%s280 + $0x18] sm:$0xff]
        %v321 = vadd.f32 %v317, %v318
        %322 = vadd.xlane.f32.xlu0 %v321
        %v323 = vpop.xlane.xlu0 %322
        %v324 = vadd.f32 %v319, %v320
        %325 = vadd.xlane.f32.xlu0 %v324
        %v326 = vpop.xlane.xlu0 %325
        %v327 = vrcp.pop 256.0
        %v328 = vmul.f32 256.0, %v327
        %v329 = vsub.f32 1.0, %v328
        %v330 = vmul.f32 %v327, %v329
        %v331 = vadd.f32 %v327, %v330
        %vm332 = vweird.f32 %v327
        %v333 = vsel %vm332, %v327, %v331
        %v334 = vmul.f32 %v323, %v333
        %v335 = vmul.f32 %v326, %v333
        %v336 = vmax.f32 %v317, %v318
        %337 = vmax.xlane.f32.xlu0 %v336
        %v338 = vpop.xlane.xlu0 %337
        %v339 = vmax.f32 %v319, %v320
        %340 = vmax.xlane.f32.xlu0 %v339
        %v341 = vpop.xlane.xlu0 %340
        %v344 = vlaneseq
        %v345 = vand.u32 %v344, 127
        %v346 = vperm.slane %v334, %v345
        %v347 = vadd.s32 %v345, 4294967288
        %v348 = vperm.slane %v335, %v347
        %vm349 = vcmask 130112
        %v350 = vsel %vm349, %v348, %v346
        %v354 = vperm.slane %v338, %v345
        %v355 = vperm.slane %v341, %v347
        %v356 = vsel %vm349, %v355, %v354
        %vm358 = vcmask 1040384
        %v359 = vsel %vm358, %v350, %v356
        %v360 = vld [vmem:[%s1] sm:$0xff]
        %v361 = vld [vmem:[%s1 + $0x8] sm:$0xff]
        %v362 = vld [vmem:[%s2] sm:$0x1]
        %v364 = vperm.slane %v362, 0
        %vm366 = vcmask 130048
        %v368 = vsel %vm366, %v359, 0
        %370 = vmatpush.msra.mxu0 0.0
        %371 = vmatpush.msra.mxu0 0.0
        %372 = vmatpush.msra.mxu0 0.0
        %373 = vmatpush.msra.mxu0 0.0
        %374 = vmatpush.msra.mxu0 0.0
        %375 = vmatpush.msra.mxu0 0.0
        %376 = vmatpush.msra.mxu0 0.0
        %377 = vmatpush.msra.mxu0 0.0
        %378 = vmatpush.msra.mxu0 0.0
        %379 = vmatpush.msra.mxu0 0.0
        %380 = vmatpush.msra.mxu0 0.0
        %381 = vmatpush.msra.mxu0 0.0
        %382 = vmatpush.msra.mxu0 0.0
        %383 = vmatpush.msra.mxu0 0.0
        %384 = vmatpush.msra.mxu0 %v361
        %385 = vmatpush.msra.mxu0 %v360
        %386 = vmatmul.f32.gmra.mxu0 %v368
        %v387 = vpop.f32.mrf.mxu0
        %v388 = vadd.f32 %v364, %v387
        %389 = vdwg.mxu0
        %v390 = vmax.f32 %v388, 0.0
        %v391 = vld [vmem:[%s3] sm:$0x3]
        %v392 = vld [vmem:[%s4] sm:$0x1]
        %v394 = vperm.slane %v392, 0
        %vm396 = vcmask 15360
        %v398 = vsel %vm396, %v390, 0
        %vm400 = vcmask 1041408
        %v402 = vsel %vm400, %v391, 0
        %404 = vmatpush.msra.mxu0 0.0
        %405 = vmatpush.msra.mxu0 0.0
        %406 = vmatpush.msra.mxu0 0.0
        %407 = vmatpush.msra.mxu0 0.0
        %408 = vmatpush.msra.mxu0 0.0
        %409 = vmatpush.msra.mxu0 0.0
        %410 = vmatpush.msra.mxu0 0.0
        %411 = vmatpush.msra.mxu0 0.0
        %412 = vmatpush.msra.mxu0 0.0
        %413 = vmatpush.msra.mxu0 0.0
        %414 = vmatpush.msra.mxu0 0.0
        %415 = vmatpush.msra.mxu0 0.0
        %416 = vmatpush.msra.mxu0 0.0
        %417 = vmatpush.msra.mxu0 0.0
        %418 = vmatpush.msra.mxu0 0.0
        %419 = vmatpush.msra.mxu0 %v402
        %420 = vmatmul.f32.gmra.mxu0 %v398
        %v421 = vpop.f32.mrf.mxu0
        %v422 = vadd.f32 %v394, %v421
        %423 = vdwg.mxu0
        %v425 = vrot.slane %v422, 1
        %v427 = vadd.f32 %v422, %v425
        %v428 = vxor.u32 %v427, 2147483648
        %v429 = vmul.f32 %v428, 1.442695
        %v430 = vpow.pop %v429
        %v431 = vadd.f32 %v430, 1.0
        %v432 = vrcp.pop %v431
        %v433 = vmul.f32 %v431, %v432
        %v434 = vsub.f32 1.0, %v433
        %v435 = vmul.f32 %v432, %v434
        %v436 = vadd.f32 %v432, %v435
        %vm437 = vweird.f32 %v431
        %vm438 = vweird.f32 %v432
        %vm439 = vmor %vm437, %vm438
        %v440 = vsel %vm439, %v432, %v436
        %v441 = vand.u32 2147483647, %v431
        %vm442 = vcmp.eq.f32.partialorder %v441, 8.507059e+37
        %v443 = vand.u32 %v431, 2147483648
        %v444 = vor.u32 1.1754944e-38, %v443
        %v445 = vsel %vm442, %v444, %v440
        %v446 = vmul.f32 1.0, %v445
        %v447 = vperm.slane %v446, 0
        %v448 = vlaneseq
        %v449 = vshrl.u32 %v448, 7
        %451 = vset.pattern.permute.xlu0 %v449
        %452 = vperm.xlu0 %451, %v447
        %v453 = vpop.permute.xlu0 %452
        %v454 = vlaneseq
        %v455 = vshrl.u32 %v454, 7
        %v456 = vadd.s32 %v455, 8
        %457 = vset.pattern.permute.xlu0 %v456
        %458 = vperm.xlu0 %457, %v447
        %v459 = vpop.permute.xlu0 %458
        %v460 = vmul.f32 %v317, %v453
        %v461 = vmul.f32 %v318, %v453
        %v462 = vmul.f32 %v319, %v459
        %v463 = vmul.f32 %v320, %v459
        %v464 = vadd.f32 %v460, %v462
        %v465 = vrot.slane %v464, 4
        %v466 = vadd.f32 %v464, %v465
        %v467 = vrot.slane %v466, 2
        %v468 = vadd.f32 %v466, %v467
        %v469 = vrot.slane %v468, 1
        %v470 = vadd.f32 %v468, %v469
        %v471 = vadd.f32 %v461, %v463
        %v472 = vrot.slane %v471, 4
        %v473 = vadd.f32 %v471, %v472
        %v474 = vrot.slane %v473, 2
        %v475 = vadd.f32 %v473, %v474
        %v476 = vrot.slane %v475, 1
        %v477 = vadd.f32 %v475, %v476
        %v478 = vrcp.pop 16.0
        %v479 = vmul.f32 16.0, %v478
        %v480 = vsub.f32 1.0, %v479
        %v481 = vmul.f32 %v478, %v480
        %v482 = vadd.f32 %v478, %v481
        %vm483 = vweird.f32 %v478
        %v484 = vsel %vm483, %v478, %v482
        %v485 = vmul.f32 %v470, %v484
        %v486 = vmul.f32 %v477, %v484
        %v487 = vmax.f32 %v460, %v462
        %v488 = vrot.slane %v487, 4
        %v489 = vmax.f32 %v487, %v488
        %v490 = vrot.slane %v489, 2
        %v491 = vmax.f32 %v489, %v490
        %v492 = vrot.slane %v491, 1
        %v493 = vmax.f32 %v491, %v492
        %v494 = vmax.f32 %v461, %v463
        %v495 = vrot.slane %v494, 4
        %v496 = vmax.f32 %v494, %v495
        %v497 = vrot.slane %v496, 2
        %v498 = vmax.f32 %v496, %v497
        %v499 = vrot.slane %v498, 1
        %v500 = vmax.f32 %v498, %v499
        %v501 = vsel %vm358, %v485, %v493
        %v502 = vsel %vm358, %v486, %v500
        %s503 = scalar_lea.vmem [#allocation6], 96
        %v504 = vld [vmem:[%s503] sm:$0xf]
        %v507 = vrot.slane %v502, 6
        %v508 = vsel %vm400, %v501, %v507
        %v510 = vmul.f32 %v504, %v508
        %v511 = vld [vmem:[#allocation6] sm:$0xf]
        %512 = vrot.lane.b32.xlu0 %v501, 51
        %v513 = vpop.permute.xlu0 %512
        %514 = vrot.lane.b32.xlu0 %v502, 51
        %v515 = vpop.permute.xlu0 %514
        %vm516 = vcmp.lt.s32.totalorder %v345, 51
        %v517 = vsel %vm516, %v513, %v515
        %v518 = vsel %vm516, %v515, %v513
        %v521 = vrot.slane %v517, 6
        %v522 = vsel %vm400, %v518, %v521
        %v524 = vmul.f32 %v511, %v522
        %v525 = vadd.f32 %v510, %v524
        %s526 = scalar_lea.vmem [#allocation6], 4
        %v527 = vld [vmem:[%s526] sm:$0xf]
        %528 = vrot.lane.b32.xlu0 %v501, 50
        %v529 = vpop.permute.xlu0 %528
        %530 = vrot.lane.b32.xlu0 %v502, 50
        %v531 = vpop.permute.xlu0 %530
        %vm532 = vcmp.lt.s32.totalorder %v345, 50
        %v533 = vsel %vm532, %v529, %v531
        %v534 = vsel %vm532, %v531, %v529
        %v537 = vrot.slane %v533, 6
        %v538 = vsel %vm400, %v534, %v537
        %v540 = vmul.f32 %v527, %v538
        %v541 = vadd.f32 %v525, %v540
        %s542 = scalar_lea.vmem [#allocation6], 8
        %v543 = vld [vmem:[%s542] sm:$0xf]
        %544 = vrot.lane.b32.xlu0 %v501, 49
        %v545 = vpop.permute.xlu0 %544
        %546 = vrot.lane.b32.xlu0 %v502, 49
        %v547 = vpop.permute.xlu0 %546
        %vm548 = vcmp.lt.s32.totalorder %v345, 49
        %v549 = vsel %vm548, %v545, %v547
        %v550 = vsel %vm548, %v547, %v545
        %v553 = vrot.slane %v549, 6
        %v554 = vsel %vm400, %v550, %v553
        %v556 = vmul.f32 %v543, %v554
        %v557 = vadd.f32 %v541, %v556
        %s558 = scalar_lea.vmem [#allocation6], 12
        %v559 = vld [vmem:[%s558] sm:$0xf]
        %560 = vrot.lane.b32.xlu0 %v501, 48
        %v561 = vpop.permute.xlu0 %560
        %562 = vrot.lane.b32.xlu0 %v502, 48
        %v563 = vpop.permute.xlu0 %562
        %vm564 = vcmp.lt.s32.totalorder %v345, 48
        %v565 = vsel %vm564, %v561, %v563
        %v566 = vsel %vm564, %v563, %v561
        %v569 = vrot.slane %v565, 6
        %v570 = vsel %vm400, %v566, %v569
        %v572 = vmul.f32 %v559, %v570
        %v573 = vadd.f32 %v557, %v572
        %s574 = scalar_lea.vmem [#allocation6], 16
        %v575 = vld [vmem:[%s574] sm:$0xf]
        %576 = vrot.lane.b32.xlu0 %v501, 47
        %v577 = vpop.permute.xlu0 %576
        %578 = vrot.lane.b32.xlu0 %v502, 47
        %v579 = vpop.permute.xlu0 %578
        %vm580 = vcmp.lt.s32.totalorder %v345, 47
        %v581 = vsel %vm580, %v577, %v579
        %v582 = vsel %vm580, %v579, %v577
        %v585 = vrot.slane %v581, 6
        %v586 = vsel %vm400, %v582, %v585
        %v588 = vmul.f32 %v575, %v586
        %v589 = vadd.f32 %v573, %v588
        %s590 = scalar_lea.vmem [#allocation6], 20
        %v591 = vld [vmem:[%s590] sm:$0xf]
        %592 = vrot.lane.b32.xlu0 %v501, 46
        %v593 = vpop.permute.xlu0 %592
        %594 = vrot.lane.b32.xlu0 %v502, 46
        %v595 = vpop.permute.xlu0 %594
        %vm596 = vcmp.lt.s32.totalorder %v345, 46
        %v597 = vsel %vm596, %v593, %v595
        %v598 = vsel %vm596, %v595, %v593
        %v601 = vrot.slane %v597, 6
        %v602 = vsel %vm400, %v598, %v601
        %v604 = vmul.f32 %v591, %v602
        %v605 = vadd.f32 %v589, %v604
        %s606 = scalar_lea.vmem [#allocation6], 24
        %v607 = vld [vmem:[%s606] sm:$0xf]
        %608 = vrot.lane.b32.xlu0 %v501, 45
        %v609 = vpop.permute.xlu0 %608
        %610 = vrot.lane.b32.xlu0 %v502, 45
        %v611 = vpop.permute.xlu0 %610
        %vm612 = vcmp.lt.s32.totalorder %v345, 45
        %v613 = vsel %vm612, %v609, %v611
        %v614 = vsel %vm612, %v611, %v609
        %v617 = vrot.slane %v613, 6
        %v618 = vsel %vm400, %v614, %v617
        %v620 = vmul.f32 %v607, %v618
        %v621 = vadd.f32 %v605, %v620
        %s622 = scalar_lea.vmem [#allocation6], 28
        %v623 = vld [vmem:[%s622] sm:$0xf]
        %624 = vrot.lane.b32.xlu0 %v501, 35
        %v625 = vpop.permute.xlu0 %624
        %626 = vrot.lane.b32.xlu0 %v502, 35
        %v627 = vpop.permute.xlu0 %626
        %vm628 = vcmp.lt.s32.totalorder %v345, 35
        %v629 = vsel %vm628, %v625, %v627
        %v630 = vsel %vm628, %v627, %v625
        %v633 = vrot.slane %v629, 6
        %v634 = vsel %vm400, %v630, %v633
        %v636 = vmul.f32 %v623, %v634
        %v637 = vadd.f32 %v621, %v636
        %s638 = scalar_lea.vmem [#allocation6], 32
        %v639 = vld [vmem:[%s638] sm:$0xf]
        %640 = vrot.lane.b32.xlu0 %v501, 34
        %v641 = vpop.permute.xlu0 %640
        %642 = vrot.lane.b32.xlu0 %v502, 34
        %v643 = vpop.permute.xlu0 %642
        %vm644 = vcmp.lt.s32.totalorder %v345, 34
        %v645 = vsel %vm644, %v641, %v643
        %v646 = vsel %vm644, %v643, %v641
        %v649 = vrot.slane %v645, 6
        %v650 = vsel %vm400, %v646, %v649
        %v652 = vmul.f32 %v639, %v650
        %v653 = vadd.f32 %v637, %v652
        %s654 = scalar_lea.vmem [#allocation6], 36
        %v655 = vld [vmem:[%s654] sm:$0xf]
        %656 = vrot.lane.b32.xlu0 %v501, 33
        %v657 = vpop.permute.xlu0 %656
        %658 = vrot.lane.b32.xlu0 %v502, 33
        %v659 = vpop.permute.xlu0 %658
        %vm660 = vcmp.lt.s32.totalorder %v345, 33
        %v661 = vsel %vm660, %v657, %v659
        %v662 = vsel %vm660, %v659, %v657
        %v665 = vrot.slane %v661, 6
        %v666 = vsel %vm400, %v662, %v665
        %v668 = vmul.f32 %v655, %v666
        %v669 = vadd.f32 %v653, %v668
        %s670 = scalar_lea.vmem [#allocation6], 40
        %v671 = vld [vmem:[%s670] sm:$0xf]
        %672 = vrot.lane.b32.xlu0 %v501, 32
        %v673 = vpop.permute.xlu0 %672
        %674 = vrot.lane.b32.xlu0 %v502, 32
        %v675 = vpop.permute.xlu0 %674
        %vm676 = vcmp.lt.s32.totalorder %v345, 32
        %v677 = vsel %vm676, %v673, %v675
        %v678 = vsel %vm676, %v675, %v673
        %v681 = vrot.slane %v677, 6
        %v682 = vsel %vm400, %v678, %v681
        %v684 = vmul.f32 %v671, %v682
        %v685 = vadd.f32 %v669, %v684
        %s686 = scalar_lea.vmem [#allocation6], 44
        %v687 = vld [vmem:[%s686] sm:$0xf]
        %688 = vrot.lane.b32.xlu0 %v501, 31
        %v689 = vpop.permute.xlu0 %688
        %690 = vrot.lane.b32.xlu0 %v502, 31
        %v691 = vpop.permute.xlu0 %690
        %vm692 = vcmp.lt.s32.totalorder %v345, 31
        %v693 = vsel %vm692, %v689, %v691
        %v694 = vsel %vm692, %v691, %v689
        %v697 = vrot.slane %v693, 6
        %v698 = vsel %vm400, %v694, %v697
        %v700 = vmul.f32 %v687, %v698
        %v701 = vadd.f32 %v685, %v700
        %s702 = scalar_lea.vmem [#allocation6], 48
        %v703 = vld [vmem:[%s702] sm:$0xf]
        %704 = vrot.lane.b32.xlu0 %v501, 30
        %v705 = vpop.permute.xlu0 %704
        %706 = vrot.lane.b32.xlu0 %v502, 30
        %v707 = vpop.permute.xlu0 %706
        %vm708 = vcmp.lt.s32.totalorder %v345, 30
        %v709 = vsel %vm708, %v705, %v707
        %v710 = vsel %vm708, %v707, %v705
        %v713 = vrot.slane %v709, 6
        %v714 = vsel %vm400, %v710, %v713
        %v716 = vmul.f32 %v703, %v714
        %v717 = vadd.f32 %v701, %v716
        %s718 = scalar_lea.vmem [#allocation6], 52
        %v719 = vld [vmem:[%s718] sm:$0xf]
        %720 = vrot.lane.b32.xlu0 %v501, 29
        %v721 = vpop.permute.xlu0 %720
        %722 = vrot.lane.b32.xlu0 %v502, 29
        %v723 = vpop.permute.xlu0 %722
        %vm724 = vcmp.lt.s32.totalorder %v345, 29
        %v725 = vsel %vm724, %v721, %v723
        %v726 = vsel %vm724, %v723, %v721
        %v729 = vrot.slane %v725, 6
        %v730 = vsel %vm400, %v726, %v729
        %v732 = vmul.f32 %v719, %v730
        %v733 = vadd.f32 %v717, %v732
        %s734 = scalar_lea.vmem [#allocation6], 56
        %v735 = vld [vmem:[%s734] sm:$0xf]
        %736 = vrot.lane.b32.xlu0 %v501, 19
        %v737 = vpop.permute.xlu0 %736
        %738 = vrot.lane.b32.xlu0 %v502, 19
        %v739 = vpop.permute.xlu0 %738
        %vm740 = vcmp.lt.s32.totalorder %v345, 19
        %v741 = vsel %vm740, %v737, %v739
        %v742 = vsel %vm740, %v739, %v737
        %v745 = vrot.slane %v741, 6
        %v746 = vsel %vm400, %v742, %v745
        %v748 = vmul.f32 %v735, %v746
        %v749 = vadd.f32 %v733, %v748
        %s750 = scalar_lea.vmem [#allocation6], 60
        %v751 = vld [vmem:[%s750] sm:$0xf]
        %752 = vrot.lane.b32.xlu0 %v501, 18
        %v753 = vpop.permute.xlu0 %752
        %754 = vrot.lane.b32.xlu0 %v502, 18
        %v755 = vpop.permute.xlu0 %754
        %vm756 = vcmp.lt.s32.totalorder %v345, 18
        %v757 = vsel %vm756, %v753, %v755
        %v758 = vsel %vm756, %v755, %v753
        %v761 = vrot.slane %v757, 6
        %v762 = vsel %vm400, %v758, %v761
        %v764 = vmul.f32 %v751, %v762
        %v765 = vadd.f32 %v749, %v764
        %s766 = scalar_lea.vmem [#allocation6], 64
        %v767 = vld [vmem:[%s766] sm:$0xf]
        %768 = vrot.lane.b32.xlu0 %v501, 17
        %v769 = vpop.permute.xlu0 %768
        %770 = vrot.lane.b32.xlu0 %v502, 17
        %v771 = vpop.permute.xlu0 %770
        %vm772 = vcmp.lt.s32.totalorder %v345, 17
        %v773 = vsel %vm772, %v769, %v771
        %v774 = vsel %vm772, %v771, %v769
        %v777 = vrot.slane %v773, 6
        %v778 = vsel %vm400, %v774, %v777
        %v780 = vmul.f32 %v767, %v778
        %v781 = vadd.f32 %v765, %v780
        %s782 = scalar_lea.vmem [#allocation6], 68
        %v783 = vld [vmem:[%s782] sm:$0xf]
        %784 = vrot.lane.b32.xlu0 %v501, 16
        %v785 = vpop.permute.xlu0 %784
        %786 = vrot.lane.b32.xlu0 %v502, 16
        %v787 = vpop.permute.xlu0 %786
        %vm788 = vcmp.lt.s32.totalorder %v345, 16
        %v789 = vsel %vm788, %v785, %v787
        %v790 = vsel %vm788, %v787, %v785
        %v793 = vrot.slane %v789, 6
        %v794 = vsel %vm400, %v790, %v793
        %v796 = vmul.f32 %v783, %v794
        %v797 = vadd.f32 %v781, %v796
        %s798 = scalar_lea.vmem [#allocation6], 72
        %v799 = vld [vmem:[%s798] sm:$0xf]
        %800 = vrot.lane.b32.xlu0 %v501, 15
        %v801 = vpop.permute.xlu0 %800
        %802 = vrot.lane.b32.xlu0 %v502, 15
        %v803 = vpop.permute.xlu0 %802
        %vm804 = vcmp.lt.s32.totalorder %v345, 15
        %v805 = vsel %vm804, %v801, %v803
        %v806 = vsel %vm804, %v803, %v801
        %v809 = vrot.slane %v805, 6
        %v810 = vsel %vm400, %v806, %v809
        %v812 = vmul.f32 %v799, %v810
        %v813 = vadd.f32 %v797, %v812
        %s814 = scalar_lea.vmem [#allocation6], 76
        %v815 = vld [vmem:[%s814] sm:$0xf]
        %816 = vrot.lane.b32.xlu0 %v501, 14
        %v817 = vpop.permute.xlu0 %816
        %818 = vrot.lane.b32.xlu0 %v502, 14
        %v819 = vpop.permute.xlu0 %818
        %vm820 = vcmp.lt.s32.totalorder %v345, 14
        %v821 = vsel %vm820, %v817, %v819
        %v822 = vsel %vm820, %v819, %v817
        %v825 = vrot.slane %v821, 6
        %v826 = vsel %vm400, %v822, %v825
        %v828 = vmul.f32 %v815, %v826
        %v829 = vadd.f32 %v813, %v828
        %s830 = scalar_lea.vmem [#allocation6], 80
        %v831 = vld [vmem:[%s830] sm:$0xf]
        %832 = vrot.lane.b32.xlu0 %v501, 13
        %v833 = vpop.permute.xlu0 %832
        %834 = vrot.lane.b32.xlu0 %v502, 13
        %v835 = vpop.permute.xlu0 %834
        %vm836 = vcmp.lt.s32.totalorder %v345, 13
        %v837 = vsel %vm836, %v833, %v835
        %v838 = vsel %vm836, %v835, %v833
        %v841 = vrot.slane %v837, 6
        %v842 = vsel %vm400, %v838, %v841
        %v844 = vmul.f32 %v831, %v842
        %v845 = vadd.f32 %v829, %v844
        %s846 = scalar_lea.vmem [#allocation6], 84
        %v847 = vld [vmem:[%s846] sm:$0xf]
        %848 = vrot.lane.b32.xlu0 %v501, 3
        %v849 = vpop.permute.xlu0 %848
        %850 = vrot.lane.b32.xlu0 %v502, 3
        %v851 = vpop.permute.xlu0 %850
        %vm852 = vcmp.lt.s32.totalorder %v345, 3
        %v853 = vsel %vm852, %v849, %v851
        %v854 = vsel %vm852, %v851, %v849
        %v857 = vrot.slane %v853, 6
        %v858 = vsel %vm400, %v854, %v857
        %v860 = vmul.f32 %v847, %v858
        %v861 = vadd.f32 %v845, %v860
        %s862 = scalar_lea.vmem [#allocation6], 88
        %v863 = vld [vmem:[%s862] sm:$0xf]
        %864 = vrot.lane.b32.xlu0 %v501, 2
        %v865 = vpop.permute.xlu0 %864
        %866 = vrot.lane.b32.xlu0 %v502, 2
        %v867 = vpop.permute.xlu0 %866
        %vm868 = vcmp.lt.s32.totalorder %v345, 2
        %v869 = vsel %vm868, %v865, %v867
        %v870 = vsel %vm868, %v867, %v865
        %v873 = vrot.slane %v869, 6
        %v874 = vsel %vm400, %v870, %v873
        %v876 = vmul.f32 %v863, %v874
        %v877 = vadd.f32 %v861, %v876
        %s878 = scalar_lea.vmem [#allocation6], 92
        %v879 = vld [vmem:[%s878] sm:$0xf]
        %880 = vrot.lane.b32.xlu0 %v501, 1
        %v881 = vpop.permute.xlu0 %880
        %882 = vrot.lane.b32.xlu0 %v502, 1
        %v883 = vpop.permute.xlu0 %882
        %vm884 = vcmp.lt.s32.totalorder %v345, 1
        %v885 = vsel %vm884, %v881, %v883
        %v886 = vsel %vm884, %v883, %v881
        %v889 = vrot.slane %v885, 6
        %v890 = vsel %vm400, %v886, %v889
        %v892 = vmul.f32 %v879, %v890
        %v893 = vadd.f32 %v877, %v892
        %s894 = scalar_lea.vmem [#allocation6], 100
        %v895 = vld [vmem:[%s894] sm:$0xf]
        %896 = vrot.lane.b32.xlu0 %v501, 127
        %v897 = vpop.permute.xlu0 %896
        %898 = vrot.lane.b32.xlu0 %v502, 127
        %v899 = vpop.permute.xlu0 %898
        %vm900 = vcmp.lt.s32.totalorder %v345, 127
        %v901 = vsel %vm900, %v897, %v899
        %v902 = vsel %vm900, %v899, %v897
        %v905 = vrot.slane %v902, 6
        %v906 = vsel %vm400, %v901, %v905
        %v908 = vmul.f32 %v895, %v906
        %v909 = vadd.f32 %v893, %v908
        %s910 = scalar_lea.vmem [#allocation6], 104
        %v911 = vld [vmem:[%s910] sm:$0xf]
        %912 = vrot.lane.b32.xlu0 %v501, 126
        %v913 = vpop.permute.xlu0 %912
        %914 = vrot.lane.b32.xlu0 %v502, 126
        %v915 = vpop.permute.xlu0 %914
        %vm916 = vcmp.lt.s32.totalorder %v345, 126
        %v917 = vsel %vm916, %v913, %v915
        %v918 = vsel %vm916, %v915, %v913
        %v921 = vrot.slane %v918, 6
        %v922 = vsel %vm400, %v917, %v921
        %v924 = vmul.f32 %v911, %v922
        %v925 = vadd.f32 %v909, %v924
        %s926 = scalar_lea.vmem [#allocation6], 108
        %v927 = vld [vmem:[%s926] sm:$0xf]
        %928 = vrot.lane.b32.xlu0 %v501, 125
        %v929 = vpop.permute.xlu0 %928
        %930 = vrot.lane.b32.xlu0 %v502, 125
        %v931 = vpop.permute.xlu0 %930
        %vm932 = vcmp.lt.s32.totalorder %v345, 125
        %v933 = vsel %vm932, %v929, %v931
        %v934 = vsel %vm932, %v931, %v929
        %v937 = vrot.slane %v934, 6
        %v938 = vsel %vm400, %v933, %v937
        %v940 = vmul.f32 %v927, %v938
        %v941 = vadd.f32 %v925, %v940
        %s942 = scalar_lea.vmem [#allocation6], 112
        %v943 = vld [vmem:[%s942] sm:$0xf]
        %944 = vrot.lane.b32.xlu0 %v501, 115
        %v945 = vpop.permute.xlu0 %944
        %946 = vrot.lane.b32.xlu0 %v502, 115
        %v947 = vpop.permute.xlu0 %946
        %vm948 = vcmp.lt.s32.totalorder %v345, 115
        %v949 = vsel %vm948, %v945, %v947
        %v950 = vsel %vm948, %v947, %v945
        %v953 = vrot.slane %v950, 6
        %v954 = vsel %vm400, %v949, %v953
        %v956 = vmul.f32 %v943, %v954
        %v957 = vadd.f32 %v941, %v956
        %s958 = scalar_lea.vmem [#allocation6], 116
        %v959 = vld [vmem:[%s958] sm:$0xf]
        %960 = vrot.lane.b32.xlu0 %v501, 114
        %v961 = vpop.permute.xlu0 %960
        %962 = vrot.lane.b32.xlu0 %v502, 114
        %v963 = vpop.permute.xlu0 %962
        %vm964 = vcmp.lt.s32.totalorder %v345, 114
        %v965 = vsel %vm964, %v961, %v963
        %v966 = vsel %vm964, %v963, %v961
        %v969 = vrot.slane %v966, 6
        %v970 = vsel %vm400, %v965, %v969
        %v972 = vmul.f32 %v959, %v970
        %v973 = vadd.f32 %v957, %v972
        %s974 = scalar_lea.vmem [#allocation6], 120
        %v975 = vld [vmem:[%s974] sm:$0xf]
        %976 = vrot.lane.b32.xlu0 %v501, 113
        %v977 = vpop.permute.xlu0 %976
        %978 = vrot.lane.b32.xlu0 %v502, 113
        %v979 = vpop.permute.xlu0 %978
        %vm980 = vcmp.lt.s32.totalorder %v345, 113
        %v981 = vsel %vm980, %v977, %v979
        %v982 = vsel %vm980, %v979, %v977
        %v985 = vrot.slane %v982, 6
        %v986 = vsel %vm400, %v981, %v985
        %v988 = vmul.f32 %v975, %v986
        %v989 = vadd.f32 %v973, %v988
        %s990 = scalar_lea.vmem [#allocation6], 124
        %v991 = vld [vmem:[%s990] sm:$0xf]
        %992 = vrot.lane.b32.xlu0 %v501, 112
        %v993 = vpop.permute.xlu0 %992
        %994 = vrot.lane.b32.xlu0 %v502, 112
        %v995 = vpop.permute.xlu0 %994
        %vm996 = vcmp.lt.s32.totalorder %v345, 112
        %v997 = vsel %vm996, %v993, %v995
        %v998 = vsel %vm996, %v995, %v993
        %v1001 = vrot.slane %v998, 6
        %v1002 = vsel %vm400, %v997, %v1001
        %v1004 = vmul.f32 %v991, %v1002
        %v1005 = vadd.f32 %v989, %v1004
        %s1006 = scalar_lea.vmem [#allocation6], 128
        %v1007 = vld [vmem:[%s1006] sm:$0xf]
        %1008 = vrot.lane.b32.xlu0 %v501, 111
        %v1009 = vpop.permute.xlu0 %1008
        %1010 = vrot.lane.b32.xlu0 %v502, 111
        %v1011 = vpop.permute.xlu0 %1010
        %vm1012 = vcmp.lt.s32.totalorder %v345, 111
        %v1013 = vsel %vm1012, %v1009, %v1011
        %v1014 = vsel %vm1012, %v1011, %v1009
        %v1017 = vrot.slane %v1014, 6
        %v1018 = vsel %vm400, %v1013, %v1017
        %v1020 = vmul.f32 %v1007, %v1018
        %v1021 = vadd.f32 %v1005, %v1020
        %s1022 = scalar_lea.vmem [#allocation6], 132
        %v1023 = vld [vmem:[%s1022] sm:$0xf]
        %1024 = vrot.lane.b32.xlu0 %v501, 110
        %v1025 = vpop.permute.xlu0 %1024
        %1026 = vrot.lane.b32.xlu0 %v502, 110
        %v1027 = vpop.permute.xlu0 %1026
        %vm1028 = vcmp.lt.s32.totalorder %v345, 110
        %v1029 = vsel %vm1028, %v1025, %v1027
        %v1030 = vsel %vm1028, %v1027, %v1025
        %v1033 = vrot.slane %v1030, 6
        %v1034 = vsel %vm400, %v1029, %v1033
        %v1036 = vmul.f32 %v1023, %v1034
        %v1037 = vadd.f32 %v1021, %v1036
        %s1038 = scalar_lea.vmem [#allocation6], 136
        %v1039 = vld [vmem:[%s1038] sm:$0xf]
        %1040 = vrot.lane.b32.xlu0 %v501, 109
        %v1041 = vpop.permute.xlu0 %1040
        %1042 = vrot.lane.b32.xlu0 %v502, 109
        %v1043 = vpop.permute.xlu0 %1042
        %vm1044 = vcmp.lt.s32.totalorder %v345, 109
        %v1045 = vsel %vm1044, %v1041, %v1043
        %v1046 = vsel %vm1044, %v1043, %v1041
        %v1049 = vrot.slane %v1046, 6
        %v1050 = vsel %vm400, %v1045, %v1049
        %v1052 = vmul.f32 %v1039, %v1050
        %v1053 = vadd.f32 %v1037, %v1052
        %s1054 = scalar_lea.vmem [#allocation6], 140
        %v1055 = vld [vmem:[%s1054] sm:$0xf]
        %1056 = vrot.lane.b32.xlu0 %v501, 99
        %v1057 = vpop.permute.xlu0 %1056
        %1058 = vrot.lane.b32.xlu0 %v502, 99
        %v1059 = vpop.permute.xlu0 %1058
        %vm1060 = vcmp.lt.s32.totalorder %v345, 99
        %v1061 = vsel %vm1060, %v1057, %v1059
        %v1062 = vsel %vm1060, %v1059, %v1057
        %v1065 = vrot.slane %v1062, 6
        %v1066 = vsel %vm400, %v1061, %v1065
        %v1068 = vmul.f32 %v1055, %v1066
        %v1069 = vadd.f32 %v1053, %v1068
        %s1070 = scalar_lea.vmem [#allocation6], 144
        %v1071 = vld [vmem:[%s1070] sm:$0xf]
        %1072 = vrot.lane.b32.xlu0 %v501, 98
        %v1073 = vpop.permute.xlu0 %1072
        %1074 = vrot.lane.b32.xlu0 %v502, 98
        %v1075 = vpop.permute.xlu0 %1074
        %vm1076 = vcmp.lt.s32.totalorder %v345, 98
        %v1077 = vsel %vm1076, %v1073, %v1075
        %v1078 = vsel %vm1076, %v1075, %v1073
        %v1081 = vrot.slane %v1078, 6
        %v1082 = vsel %vm400, %v1077, %v1081
        %v1084 = vmul.f32 %v1071, %v1082
        %v1085 = vadd.f32 %v1069, %v1084
        %s1086 = scalar_lea.vmem [#allocation6], 148
        %v1087 = vld [vmem:[%s1086] sm:$0xf]
        %1088 = vrot.lane.b32.xlu0 %v501, 97
        %v1089 = vpop.permute.xlu0 %1088
        %1090 = vrot.lane.b32.xlu0 %v502, 97
        %v1091 = vpop.permute.xlu0 %1090
        %vm1092 = vcmp.lt.s32.totalorder %v345, 97
        %v1093 = vsel %vm1092, %v1089, %v1091
        %v1094 = vsel %vm1092, %v1091, %v1089
        %v1097 = vrot.slane %v1094, 6
        %v1098 = vsel %vm400, %v1093, %v1097
        %v1100 = vmul.f32 %v1087, %v1098
        %v1101 = vadd.f32 %v1085, %v1100
        %s1102 = scalar_lea.vmem [#allocation6], 152
        %v1103 = vld [vmem:[%s1102] sm:$0xf]
        %1104 = vrot.lane.b32.xlu0 %v501, 96
        %v1105 = vpop.permute.xlu0 %1104
        %1106 = vrot.lane.b32.xlu0 %v502, 96
        %v1107 = vpop.permute.xlu0 %1106
        %vm1108 = vcmp.lt.s32.totalorder %v345, 96
        %v1109 = vsel %vm1108, %v1105, %v1107
        %v1110 = vsel %vm1108, %v1107, %v1105
        %v1113 = vrot.slane %v1110, 6
        %v1114 = vsel %vm400, %v1109, %v1113
        %v1116 = vmul.f32 %v1103, %v1114
        %v1117 = vadd.f32 %v1101, %v1116
        %s1118 = scalar_lea.vmem [#allocation6], 156
        %v1119 = vld [vmem:[%s1118] sm:$0xf]
        %1120 = vrot.lane.b32.xlu0 %v501, 95
        %v1121 = vpop.permute.xlu0 %1120
        %1122 = vrot.lane.b32.xlu0 %v502, 95
        %v1123 = vpop.permute.xlu0 %1122
        %vm1124 = vcmp.lt.s32.totalorder %v345, 95
        %v1125 = vsel %vm1124, %v1121, %v1123
        %v1126 = vsel %vm1124, %v1123, %v1121
        %v1129 = vrot.slane %v1126, 6
        %v1130 = vsel %vm400, %v1125, %v1129
        %v1132 = vmul.f32 %v1119, %v1130
        %v1133 = vadd.f32 %v1117, %v1132
        %s1134 = scalar_lea.vmem [#allocation6], 160
        %v1135 = vld [vmem:[%s1134] sm:$0xf]
        %1136 = vrot.lane.b32.xlu0 %v501, 94
        %v1137 = vpop.permute.xlu0 %1136
        %1138 = vrot.lane.b32.xlu0 %v502, 94
        %v1139 = vpop.permute.xlu0 %1138
        %vm1140 = vcmp.lt.s32.totalorder %v345, 94
        %v1141 = vsel %vm1140, %v1137, %v1139
        %v1142 = vsel %vm1140, %v1139, %v1137
        %v1145 = vrot.slane %v1142, 6
        %v1146 = vsel %vm400, %v1141, %v1145
        %v1148 = vmul.f32 %v1135, %v1146
        %v1149 = vadd.f32 %v1133, %v1148
        %s1150 = scalar_lea.vmem [#allocation6], 164
        %v1151 = vld [vmem:[%s1150] sm:$0xf]
        %1152 = vrot.lane.b32.xlu0 %v501, 93
        %v1153 = vpop.permute.xlu0 %1152
        %1154 = vrot.lane.b32.xlu0 %v502, 93
        %v1155 = vpop.permute.xlu0 %1154
        %vm1156 = vcmp.lt.s32.totalorder %v345, 93
        %v1157 = vsel %vm1156, %v1153, %v1155
        %v1158 = vsel %vm1156, %v1155, %v1153
        %v1161 = vrot.slane %v1158, 6
        %v1162 = vsel %vm400, %v1157, %v1161
        %v1164 = vmul.f32 %v1151, %v1162
        %v1165 = vadd.f32 %v1149, %v1164
        %s1166 = scalar_lea.vmem [#allocation6], 168
        %v1167 = vld [vmem:[%s1166] sm:$0xf]
        %1168 = vrot.lane.b32.xlu0 %v501, 83
        %v1169 = vpop.permute.xlu0 %1168
        %1170 = vrot.lane.b32.xlu0 %v502, 83
        %v1171 = vpop.permute.xlu0 %1170
        %vm1172 = vcmp.lt.s32.totalorder %v345, 83
        %v1173 = vsel %vm1172, %v1169, %v1171
        %v1174 = vsel %vm1172, %v1171, %v1169
        %v1177 = vrot.slane %v1174, 6
        %v1178 = vsel %vm400, %v1173, %v1177
        %v1180 = vmul.f32 %v1167, %v1178
        %v1181 = vadd.f32 %v1165, %v1180
        %s1182 = scalar_lea.vmem [#allocation6], 172
        %v1183 = vld [vmem:[%s1182] sm:$0xf]
        %1184 = vrot.lane.b32.xlu0 %v501, 82
        %v1185 = vpop.permute.xlu0 %1184
        %1186 = vrot.lane.b32.xlu0 %v502, 82
        %v1187 = vpop.permute.xlu0 %1186
        %vm1188 = vcmp.lt.s32.totalorder %v345, 82
        %v1189 = vsel %vm1188, %v1185, %v1187
        %v1190 = vsel %vm1188, %v1187, %v1185
        %v1193 = vrot.slane %v1190, 6
        %v1194 = vsel %vm400, %v1189, %v1193
        %v1196 = vmul.f32 %v1183, %v1194
        %v1197 = vadd.f32 %v1181, %v1196
        %s1198 = scalar_lea.vmem [#allocation6], 176
        %v1199 = vld [vmem:[%s1198] sm:$0xf]
        %1200 = vrot.lane.b32.xlu0 %v501, 81
        %v1201 = vpop.permute.xlu0 %1200
        %1202 = vrot.lane.b32.xlu0 %v502, 81
        %v1203 = vpop.permute.xlu0 %1202
        %vm1204 = vcmp.lt.s32.totalorder %v345, 81
        %v1205 = vsel %vm1204, %v1201, %v1203
        %v1206 = vsel %vm1204, %v1203, %v1201
        %v1209 = vrot.slane %v1206, 6
        %v1210 = vsel %vm400, %v1205, %v1209
        %v1212 = vmul.f32 %v1199, %v1210
        %v1213 = vadd.f32 %v1197, %v1212
        %s1214 = scalar_lea.vmem [#allocation6], 180
        %v1215 = vld [vmem:[%s1214] sm:$0xf]
        %1216 = vrot.lane.b32.xlu0 %v501, 80
        %v1217 = vpop.permute.xlu0 %1216
        %1218 = vrot.lane.b32.xlu0 %v502, 80
        %v1219 = vpop.permute.xlu0 %1218
        %vm1220 = vcmp.lt.s32.totalorder %v345, 80
        %v1221 = vsel %vm1220, %v1217, %v1219
        %v1222 = vsel %vm1220, %v1219, %v1217
        %v1225 = vrot.slane %v1222, 6
        %v1226 = vsel %vm400, %v1221, %v1225
        %v1228 = vmul.f32 %v1215, %v1226
        %v1229 = vadd.f32 %v1213, %v1228
        %s1230 = scalar_lea.vmem [#allocation6], 184
        %v1231 = vld [vmem:[%s1230] sm:$0xf]
        %1232 = vrot.lane.b32.xlu0 %v501, 79
        %v1233 = vpop.permute.xlu0 %1232
        %1234 = vrot.lane.b32.xlu0 %v502, 79
        %v1235 = vpop.permute.xlu0 %1234
        %vm1236 = vcmp.lt.s32.totalorder %v345, 79
        %v1237 = vsel %vm1236, %v1233, %v1235
        %v1238 = vsel %vm1236, %v1235, %v1233
        %v1241 = vrot.slane %v1238, 6
        %v1242 = vsel %vm400, %v1237, %v1241
        %v1244 = vmul.f32 %v1231, %v1242
        %v1245 = vadd.f32 %v1229, %v1244
        %s1246 = scalar_lea.vmem [#allocation6], 188
        %v1247 = vld [vmem:[%s1246] sm:$0xf]
        %1248 = vrot.lane.b32.xlu0 %v501, 78
        %v1249 = vpop.permute.xlu0 %1248
        %1250 = vrot.lane.b32.xlu0 %v502, 78
        %v1251 = vpop.permute.xlu0 %1250
        %vm1252 = vcmp.lt.s32.totalorder %v345, 78
        %v1253 = vsel %vm1252, %v1249, %v1251
        %v1254 = vsel %vm1252, %v1251, %v1249
        %v1257 = vrot.slane %v1254, 6
        %v1258 = vsel %vm400, %v1253, %v1257
        %v1260 = vmul.f32 %v1247, %v1258
        %v1261 = vadd.f32 %v1245, %v1260
        %s1262 = scalar_lea.vmem [#allocation6], 192
        %v1263 = vld [vmem:[%s1262] sm:$0xf]
        %1264 = vrot.lane.b32.xlu0 %v501, 77
        %v1265 = vpop.permute.xlu0 %1264
        %1266 = vrot.lane.b32.xlu0 %v502, 77
        %v1267 = vpop.permute.xlu0 %1266
        %vm1268 = vcmp.lt.s32.totalorder %v345, 77
        %v1269 = vsel %vm1268, %v1265, %v1267
        %v1270 = vsel %vm1268, %v1267, %v1265
        %v1273 = vrot.slane %v1270, 6
        %v1274 = vsel %vm400, %v1269, %v1273
        %v1276 = vmul.f32 %v1263, %v1274
        %v1277 = vadd.f32 %v1261, %v1276
        %v1279 = vrot.slane %v1277, 7
        %v1280 = vrot.slane %v1279, 2
        %v1282 = vadd.f32 %v1277, %v1280
        %s1283 = sld [smem:[#allocation2]]
        %v1284 = vstv %s1283
        %v1285 = vadd.f32 %v1282, %v1284
        %v1286 = vxor.u32 %v1285, 2147483648
        %v1287 = vmul.f32 %v1286, 1.442695
        %v1288 = vpow.pop %v1287
        %v1289 = vadd.f32 %v1288, 1.0
        %v1290 = vrcp.pop %v1289
        %v1291 = vmul.f32 %v1289, %v1290
        %v1292 = vsub.f32 1.0, %v1291
        %v1293 = vmul.f32 %v1290, %v1292
        %v1294 = vadd.f32 %v1290, %v1293
        %vm1295 = vweird.f32 %v1289
        %vm1296 = vweird.f32 %v1290
        %vm1297 = vmor %vm1295, %vm1296
        %v1298 = vsel %vm1297, %v1290, %v1294
        %v1299 = vand.u32 2147483647, %v1289
        %vm1300 = vcmp.eq.f32.partialorder %v1299, 8.507059e+37
        %v1301 = vand.u32 %v1289, 2147483648
        %v1302 = vor.u32 1.1754944e-38, %v1301
        %v1303 = vsel %vm1300, %v1302, %v1298
        %v1304 = vmul.f32 1.0, %v1303
        %v1306 = vperm.slane %v1304, 0
        %v1307 = vperm.slane %v1304, 2
        %v1310 = vperm.slane %v1306, 0
        %v1311 = vperm.slane %v1307, 0
        %v1312 = vmul.f32 %v460, %v1310
        %v1313 = vmul.f32 %v461, %v1311
        %v1314 = vmul.f32 %v462, %v1310
        %v1315 = vmul.f32 %v463, %v1311
        %1316 = vst [vmem:[%s316] sm:$0xff] %v1312
        %1317 = vst [vmem:[%s316 + $0x8] sm:$0xff] %v1313
        %1318 = vst [vmem:[%s316 + $0x10] sm:$0xff] %v1314
        %1319 = vst [vmem:[%s316 + $0x18] sm:$0xff] %v1315
        %s1320 = sand.u32 %s186, 1
        %s1321 = scalar_lea.sflag [#allocation5], %s1320
        %s1322 = sand.u32 %s186, 1
        %s1323 = smul.addr %s1322, 32
        %s1324 = scalar_lea.vmem [#allocation8], %s1323
        // Predicated region
        $region57: #{tpu_custom_call.1} parent=47 // pred_check
          %p1325 = pneg %p196
        $region58: #{tpu_custom_call.1} parent=47 // pred_check_branch
          %1327 = sbr.rel (%p1325) target = $region60
        $region59: #{tpu_custom_call.1} parent=47 // pred_region
          %1329 = vsyncadd %s1321, 0
          %s1330 = smul.addr %s26, 4
          %s1331 = smul.addr %s1330, 8
          %s1332 = scalar_lea.hbm %s7, %s1331
          %s1333 = sshll.u32 %s1324, 4
          %s1334 = int_to_ptr.vmem [resolvable:$true] %s1333
          %s1335 = sshll.u32 %s1332, 4
          %s1336 = int_to_ptr.hbm [resolvable:$true] %s1335
          %1341 = dma.vmem_to_hbm [thread:$0]  %s1334, 512, %s1336, %s1321, 256, 256, 16
        $region60: #{tpu_custom_call.1} parent=47 // pred_fallthru
          _
      $region48: #{tpu_custom_call.1} parent=5 // pred_fallthru
        _
      %p1342 = scmp.le.s32.totalorder 2, %s21
      // Predicated region
      $region61: #{tpu_custom_call.1} parent=5 // pred_check
        %p1343 = pneg %p1342
      $region62: #{tpu_custom_call.1} parent=5 // pred_check_branch
        %1345 = sbr.rel (%p1343) target = $region64
      $region63: #{tpu_custom_call.1} parent=5 // pred_region
        %s1346 = ssub.s32 %s21, 2
        // Predicated region
        $region65: #{tpu_custom_call.1} parent=63 // pred_check
          %p1347 = pneg %p202
        $region66: #{tpu_custom_call.1} parent=63 // pred_check_branch
          %1349 = sbr.rel (%p1347) target = $region68
        $region67: #{tpu_custom_call.1} parent=63 // pred_region
          %s1350 = sand.u32 %s187, 1
          %s1351 = scalar_lea.sflag [#allocation5], %s1350
          %s1352 = sand.u32 %s187, 1
          %s1353 = smul.addr %s1352, 32
          %s1354 = scalar_lea.vmem [#allocation8], %s1353
          %1356 = dma.done %s1351, 512
        $region68: #{tpu_custom_call.1} parent=63 // pred_fallthru
          _
      $region64: #{tpu_custom_call.1} parent=5 // pred_fallthru
        _
    $region6: #{tpu_custom_call.1} parent=1 // loop_footer
      %s25 = sadd.s32 1, %s21
    $region7: #{tpu_custom_call.1} parent=1 // loop_footer_branch
      %20 = sbr.rel target = $region3
    $region8: #{tpu_custom_call.1} parent=1 // loop_exit
      _
    %1357 = vsyncpa [#allocation4], 1
    %s1358 = scalar_lea.sflag [#allocation4], 1
    %1359 = vsyncpa %s1358, 1
    %1360 = vsyncpa [#allocation7], 1
    %1361 = vsyncpa [#allocation5], 1
    %s1362 = scalar_lea.sflag [#allocation5], 1
    %1363 = vsyncpa %s1362, 1

</llo_original>
